<compile_context>
chip_gen: v6e
topology: v6e:2x2x1
jax: 0.10.0
libtpu: 0.0.40
codegen_flags: <defaults>
</compile_context>

<pallas_src>
import functools

import jax
import jax.numpy as jnp
from jax import lax
from jax.experimental import pallas as pl
from jax.experimental.pallas import tpu as pltpu

# ---------------- small MLA-consistent config ----------------
B = 2
S = 8
HIDDEN = 64
NUM_HEADS = 4
Q_LORA_RANK = 32
KV_LORA_RANK = 32
QK_ROPE_HEAD_DIM = 16
QK_NOPE_HEAD_DIM = 16
QK_HEAD_DIM = QK_NOPE_HEAD_DIM + QK_ROPE_HEAD_DIM   # 32
V_HEAD_DIM = 16
ROPE_THETA = 10000.0
RMS_EPS = 1e-6
SCALING = QK_HEAD_DIM ** (-0.5)   # rope_scaling is None -> no yarn mscale correction


# ---------------- fused Pallas kernel ----------------
def _mla_fused_kernel(x_ref, cos_ref, sin_ref, rot_ref,
                      wqa_ref, wqb_ref, wkva_ref, wkvb_ref, wo_ref,
                      *rest, scaling, eps, causal, out_weights):
    rest = list(rest)
    mask_ref = None if causal else rest.pop(0)
    o_ref = rest.pop(0)
    w_ref = rest.pop(0) if out_weights else None
    o_slab = rest.pop(0)                                   # VMEM scratch [S, nH*V]

    f32 = jnp.float32
    nh, nope, r, vd = NUM_HEADS, QK_NOPE_HEAD_DIM, QK_ROPE_HEAD_DIM, V_HEAD_DIM
    seq = x_ref.shape[0]

    x = x_ref[...].astype(f32)                             # [S, H]
    cos_q = cos_ref[...].astype(f32)                       # [S, nH*R] (host-tiled per head)
    sin_q = sin_ref[...].astype(f32)                       # [S, nH*R]
    rot = rot_ref[...].astype(f32)                         # [nH*R, nH*R] block-diag signed perm

    def rmsnorm(v):                                        # LN gains folded into next proj (host)
        var = jnp.mean(v * v, axis=-1, keepdims=True)
        return v * lax.rsqrt(var + eps)

    # ---- query path: q_b_proj(q_a_layernorm(q_a_proj(x))) ----
    q_a = rmsnorm(jnp.dot(x, wqa_ref[...], preferred_element_type=f32))     # [S, Lq]
    q2d = jnp.dot(q_a, wqb_ref[...], preferred_element_type=f32)            # [S, nH*nope | nH*r]
    q_nope = q2d[:, :nh * nope]
    q_rope_in = q2d[:, nh * nope:]
    # RoPE for ALL query heads at once: one block-diagonal MXU push + slab-wide mul/add.
    q_rope = (q_rope_in * cos_q
              + jnp.dot(q_rope_in, rot, preferred_element_type=f32) * sin_q)

    # ---- kv path: kv_a_proj_with_mqa -> split -> RMSNorm -> kv_b_proj ----
    ckv = jnp.dot(x, wkva_ref[...], preferred_element_type=f32)             # [S, Lkv + r]
    kv2d = jnp.dot(rmsnorm(ckv[:, :KV_LORA_RANK]), wkvb_ref[...],
                   preferred_element_type=f32)                              # [S, nH*nope | nH*v]
    k_nope = kv2d[:, :nh * nope]
    v_all = kv2d[:, nh * nope:]
    k_rot_in = ckv[:, KV_LORA_RANK:]                                        # [S, r] head-shared
    cos_k = cos_q[:, :r]                                                    # head-0 slab == cos
    sin_k = sin_q[:, :r]
    k_rot = (k_rot_in * cos_k
             + jnp.dot(k_rot_in, rot[:r, :r], preferred_element_type=f32) * sin_k)

    # ---- additive mask ----
    if causal:
        rows = lax.broadcasted_iota(jnp.int32, (seq, seq), 0)
        cols = lax.broadcasted_iota(jnp.int32, (seq, seq), 1)
        mask = jnp.where(cols <= rows, 0.0, jnp.finfo(f32).min).astype(f32)
    else:
        mask = mask_ref[...].astype(f32)

    dn = (((1,), (1,)), ((), ()))      # contract last dims: q @ k^T without materializing k^T
    # TODO(synk): at production head counts replace the static unroll with lax.fori_loop or a
    #             head-tile grid axis, and use MLA weight absorption for latent-rank contraction.
    for h in range(nh):
        qn = q_nope[:, h * nope:(h + 1) * nope]
        qr = q_rope[:, h * r:(h + 1) * r]
        kn = k_nope[:, h * nope:(h + 1) * nope]
        vh = v_all[:, h * vd:(h + 1) * vd]

        s = (lax.dot_general(qn, kn, dn, preferred_element_type=f32)
             + lax.dot_general(qr, k_rot, dn, preferred_element_type=f32))
        s = s * scaling + mask
        s = s - jnp.max(s, axis=-1, keepdims=True)
        e = jnp.exp(s)
        # reciprocal-multiply (TODO(synk): approx=True uses the idle EUP slot in production)
        p = e * pl.reciprocal(jnp.sum(e, axis=-1, keepdims=True), approx=False)

        o_slab[:, h * vd:(h + 1) * vd] = jnp.dot(p, vh, preferred_element_type=f32)
        if out_weights:
            w_ref[h] = p.astype(w_ref.dtype)

    # single o_proj matmul with contraction nH*V (column order of o_slab matches Wo row order)
    o_ref[...] = jnp.dot(o_slab[...], wo_ref[...],
                         preferred_element_type=f32).astype(o_ref.dtype)


# ---------------- host-side weight preparation ----------------
def _rotate_half_matrix(r):
    # x @ M == rotate_half(x) for the HF non-interleaved convention.
    i = jnp.arange(r)
    m = jnp.zeros((r, r), jnp.float32)
    return m.at[(i + r // 2) % r, i].set(jnp.where(i < r // 2, -1.0, 1.0))


def _prep_weights(params):
    # TODO(synk): in a real model pre-fold/permute once at load time, not per forward call.
    heads = jnp.arange(NUM_HEADS)
    dq = QK_HEAD_DIM
    dkv = QK_NOPE_HEAD_DIM + V_HEAD_DIM

    q_nope_cols = (heads[:, None] * dq + jnp.arange(QK_NOPE_HEAD_DIM)[None, :]).reshape(-1)
    q_rope_cols = (heads[:, None] * dq + QK_NOPE_HEAD_DIM
                   + jnp.arange(QK_ROPE_HEAD_DIM)[None, :]).reshape(-1)
    kv_nope_cols = (heads[:, None] * dkv + jnp.arange(QK_NOPE_HEAD_DIM)[None, :]).reshape(-1)
    kv_v_cols = (heads[:, None] * dkv + QK_NOPE_HEAD_DIM
                 + jnp.arange(V_HEAD_DIM)[None, :]).reshape(-1)

    # Fold RMSNorm gains into the following projection, then permute to head-major slabs.
    wqb_eff = (params["q_a_ln"][:, None] * params["q_b_proj"])[
        :, jnp.concatenate([q_nope_cols, q_rope_cols])]
    wkvb_eff = (params["kv_a_ln"][:, None] * params["kv_b_proj"])[
        :, jnp.concatenate([kv_nope_cols, kv_v_cols])]
    rot = jnp.kron(jnp.eye(NUM_HEADS, dtype=jnp.float32),
                   _rotate_half_matrix(QK_ROPE_HEAD_DIM))
    return wqb_eff, wkvb_eff, rot


def mla_attention_forward(params, hidden_states, position_embeddings,
                          attention_mask=None, output_attentions=True):
    """hidden_states: [B,S,H]; cos/sin: [B,S,R] or [S,R]; attention_mask: [B,1,S,S] additive
    (None -> causal mask is generated in-kernel)."""
    Bz, Sq, H = hidden_states.shape
    cos, sin = position_embeddings
    if cos.ndim == 3:          # positions shared across batch (standard HF setup)
        cos, sin = cos[0], sin[0]
    R = cos.shape[-1]
    cos_q = jnp.tile(cos.astype(jnp.float32), (1, NUM_HEADS))   # [S, nH*R], head-major
    sin_q = jnp.tile(sin.astype(jnp.float32), (1, NUM_HEADS))

    wqb_eff, wkvb_eff, rot = _prep_weights(params)
    causal = attention_mask is None

    kernel = functools.partial(_mla_fused_kernel, scaling=SCALING, eps=RMS_EPS,
                               causal=causal, out_weights=output_attentions)

    def const_spec(shape):
        n = len(shape)
        return pl.BlockSpec(shape, lambda b, n=n: (0,) * n)   # resident across grid steps

    in_specs = [
        pl.BlockSpec((None, Sq, H), lambda b: (b, 0, 0)),      # hidden_states, per batch
        const_spec((Sq, NUM_HEADS * R)),                        # cos slab (batch-shared)
        const_spec((Sq, NUM_HEADS * R)),                        # sin slab (batch-shared)
        const_spec((NUM_HEADS * R, NUM_HEADS * R)),             # block-diag rotate_half matrix
        const_spec(params["q_a_proj"].shape),
        const_spec(wqb_eff.shape),
        const_spec(params["kv_a_proj"].shape),
        const_spec(wkvb_eff.shape),
        const_spec(params["o_proj"].shape),
    ]
    inputs = [hidden_states, cos_q, sin_q, rot,
              params["q_a_proj"], wqb_eff, params["kv_a_proj"], wkvb_eff, params["o_proj"]]
    if not causal:
        in_specs.append(pl.BlockSpec((None, None, Sq, Sq), lambda b: (b, 0, 0, 0)))
        inputs.append(attention_mask)

    out_shape = jax.ShapeDtypeStruct((Bz, Sq, H), hidden_states.dtype)
    out_specs = pl.BlockSpec((None, Sq, H), lambda b: (b, 0, 0))
    if output_attentions:
        out_shape = (out_shape, jax.ShapeDtypeStruct((Bz, NUM_HEADS, Sq, Sq), jnp.float32))
        out_specs = (out_specs, pl.BlockSpec((None, NUM_HEADS, Sq, Sq), lambda b: (b, 0, 0, 0)))

    result = pl.pallas_call(
        kernel,
        out_shape=out_shape,
        grid=(Bz,),
        in_specs=in_specs,
        out_specs=out_specs,
        scratch_shapes=[pltpu.VMEM((Sq, NUM_HEADS * V_HEAD_DIM), jnp.float32)],
        compiler_params=pltpu.CompilerParams(dimension_semantics=("parallel",)),
    )(*inputs)

    if output_attentions:
        return result
    return result, None


# ---------------- plain-JAX helpers (host-side setup) ----------------
def rotate_half(x):
    half = x.shape[-1] // 2
    return jnp.concatenate([-x[..., half:], x[..., :half]], axis=-1)


def apply_rotary_pos_emb(q, k, cos, sin):
    cos = cos[:, None, :, :]   # unsqueeze_dim = 1
    sin = sin[:, None, :, :]
    return q * cos + rotate_half(q) * sin, k * cos + rotate_half(k) * sin


def rope_cos_sin(batch, seq, dim, theta):
    inv_freq = 1.0 / (theta ** (jnp.arange(0, dim, 2, dtype=jnp.float32) / dim))
    pos = jnp.arange(seq, dtype=jnp.float32)
    freqs = pos[:, None] * inv_freq[None, :]
    emb = jnp.concatenate([freqs, freqs], axis=-1)
    cos = jnp.broadcast_to(jnp.cos(emb)[None], (batch, seq, dim))
    sin = jnp.broadcast_to(jnp.sin(emb)[None], (batch, seq, dim))
    return cos, sin


def init_params(key):
    ks = jax.random.split(key, 7)

    def w(k, shape):
        return 0.02 * jax.random.normal(k, shape, dtype=jnp.float32)

    # Weights stored as [in, out] (transpose of torch nn.Linear [out, in]);
    # attention_bias=False -> no bias terms. Non-trivial RMSNorm gains to exercise the folding.
    return {
        "q_a_proj": w(ks[0], (HIDDEN, Q_LORA_RANK)),
        "q_a_ln": 1.0 + 0.1 * jax.random.normal(ks[5], (Q_LORA_RANK,), dtype=jnp.float32),
        "q_b_proj": w(ks[1], (Q_LORA_RANK, NUM_HEADS * QK_HEAD_DIM)),
        "kv_a_proj": w(ks[2], (HIDDEN, KV_LORA_RANK + QK_ROPE_HEAD_DIM)),
        "kv_a_ln": 1.0 + 0.1 * jax.random.normal(ks[6], (KV_LORA_RANK,), dtype=jnp.float32),
        "kv_b_proj": w(ks[3], (KV_LORA_RANK, NUM_HEADS * (QK_NOPE_HEAD_DIM + V_HEAD_DIM))),
        "o_proj": w(ks[4], (NUM_HEADS * V_HEAD_DIM, HIDDEN)),
    }


# ---------------- pure-jnp reference for correctness ----------------
def mla_reference(params, hidden_states, position_embeddings, attention_mask):
    Bz, Sq, H = hidden_states.shape
    x2d = hidden_states.reshape(Bz * Sq, H)

    q_a = x2d @ params["q_a_proj"]
    var = jnp.mean(q_a ** 2, axis=-1, keepdims=True)
    q_a = params["q_a_ln"] * (q_a * lax.rsqrt(var + RMS_EPS))
    q = (q_a @ params["q_b_proj"]).reshape(Bz, Sq, NUM_HEADS, QK_HEAD_DIM).transpose(0, 2, 1, 3)
    q_pass, q_rot = q[..., :QK_NOPE_HEAD_DIM], q[..., QK_NOPE_HEAD_DIM:]

    ckv = x2d @ params["kv_a_proj"]
    k_pass2d, k_rot2d = ckv[:, :KV_LORA_RANK], ckv[:, KV_LORA_RANK:]
    var = jnp.mean(k_pass2d ** 2, axis=-1, keepdims=True)
    k_pass2d = params["kv_a_ln"] * (k_pass2d * lax.rsqrt(var + RMS_EPS))
    kv = (k_pass2d @ params["kv_b_proj"]).reshape(
        Bz, Sq, NUM_HEADS, QK_NOPE_HEAD_DIM + V_HEAD_DIM).transpose(0, 2, 1, 3)
    k_pass, v = kv[..., :QK_NOPE_HEAD_DIM], kv[..., QK_NOPE_HEAD_DIM:]
    k_rot = k_rot2d.reshape(Bz, 1, Sq, QK_ROPE_HEAD_DIM)

    cos, sin = position_embeddings
    q_rot, k_rot = apply_rotary_pos_emb(q_rot, k_rot, cos, sin)
    k_rot = jnp.broadcast_to(k_rot, (Bz, NUM_HEADS, Sq, QK_ROPE_HEAD_DIM))
    qs = jnp.concatenate([q_pass, q_rot], axis=-1)
    ks = jnp.concatenate([k_pass, k_rot], axis=-1)

    s = jnp.einsum("bhqd,bhkd->bhqk", qs, ks) * SCALING + attention_mask
    p = jax.nn.softmax(s.astype(jnp.float32), axis=-1)
    o = jnp.einsum("bhqk,bhkd->bhqd", p, v)
    o = o.transpose(0, 2, 1, 3).reshape(Bz, Sq, NUM_HEADS * V_HEAD_DIM)
    return o @ params["o_proj"], p


if __name__ == "__main__":
    key = jax.random.PRNGKey(0)
    kp, kx = jax.random.split(key)
    params = init_params(kp)
    hidden_states = jax.random.normal(kx, (B, S, HIDDEN), dtype=jnp.float32)

    cos, sin = rope_cos_sin(B, S, QK_ROPE_HEAD_DIM, ROPE_THETA)

    # HF-style additive causal mask [B, 1, S, S] (for the reference and the explicit-mask path)
    neg = jnp.finfo(jnp.float32).min
    idx = jnp.arange(S)
    causal = jnp.where(idx[None, :] <= idx[:, None], 0.0, neg).astype(jnp.float32)
    attention_mask = jnp.broadcast_to(causal[None, None], (B, 1, S, S))

    ref_out, ref_w = mla_reference(params, hidden_states, (cos, sin), attention_mask)

    # Path 1: causal mask generated in-kernel, attention weights requested.
    out, attn_w = mla_attention_forward(params, hidden_states, (cos, sin),
                                        attention_mask=None, output_attentions=True)
    out = jax.block_until_ready(out)
    attn_w = jax.block_until_ready(attn_w)
    assert out.shape == (B, S, HIDDEN) and attn_w.shape == (B, NUM_HEADS, S, S)
    assert jnp.allclose(out, ref_out, rtol=1e-4, atol=1e-4)
    assert jnp.allclose(attn_w, ref_w, rtol=1e-4, atol=1e-4)

    # Path 2: explicit additive mask DMAed in, attention-weights writeback dropped.
    out2, _ = mla_attention_forward(params, hidden_states, (cos, sin),
                                    attention_mask=attention_mask, output_attentions=False)
    out2 = jax.block_until_ready(out2)
    assert jnp.allclose(out2, ref_out, rtol=1e-4, atol=1e-4)

    print("KERNEL_OK")
</pallas_src>

<mosaic_0001>
module attributes {stable_mosaic.version = 11 : i64} {
  func.func @_mla_fused_kernel(%arg0: i32, %arg1: memref<1x8x64xf32, #tpu.memory_space<vmem>>, %arg2: memref<8x64xf32, #tpu.memory_space<vmem>>, %arg3: memref<8x64xf32, #tpu.memory_space<vmem>>, %arg4: memref<64x64xf32, #tpu.memory_space<vmem>>, %arg5: memref<64x32xf32, #tpu.memory_space<vmem>>, %arg6: memref<32x128xf32, #tpu.memory_space<vmem>>, %arg7: memref<64x48xf32, #tpu.memory_space<vmem>>, %arg8: memref<32x128xf32, #tpu.memory_space<vmem>>, %arg9: memref<64x64xf32, #tpu.memory_space<vmem>>, %arg10: memref<1x8x64xf32, #tpu.memory_space<vmem>>, %arg11: memref<1x4x8x8xf32, #tpu.memory_space<vmem>>, %arg12: memref<8x64xf32, #tpu.memory_space<vmem>>) attributes {dimension_semantics = [#tpu.dimension_semantics<parallel>], iteration_bounds = array<i64: 2>, scalar_prefetch = 0 : i64, scratch_operands = 1 : i64, tpu.core_type = #tpu.core_type<tc>, window_params = [{transform_indices = @transform_0, window_bounds = array<i64: 1, 8, 64>}, {pipeline_mode = #tpu.pipeline_mode<synchronous>, transform_indices = @transform_1, window_bounds = array<i64: 8, 64>}, {pipeline_mode = #tpu.pipeline_mode<synchronous>, transform_indices = @transform_2, window_bounds = array<i64: 8, 64>}, {pipeline_mode = #tpu.pipeline_mode<synchronous>, transform_indices = @transform_3, window_bounds = array<i64: 64, 64>}, {pipeline_mode = #tpu.pipeline_mode<synchronous>, transform_indices = @transform_4, window_bounds = array<i64: 64, 32>}, {pipeline_mode = #tpu.pipeline_mode<synchronous>, transform_indices = @transform_5, window_bounds = array<i64: 32, 128>}, {pipeline_mode = #tpu.pipeline_mode<synchronous>, transform_indices = @transform_6, window_bounds = array<i64: 64, 48>}, {pipeline_mode = #tpu.pipeline_mode<synchronous>, transform_indices = @transform_7, window_bounds = array<i64: 32, 128>}, {pipeline_mode = #tpu.pipeline_mode<synchronous>, transform_indices = @transform_8, window_bounds = array<i64: 64, 64>}, {transform_indices = @transform_9, window_bounds = array<i64: 1, 8, 64>}, {transform_indices = @transform_10, window_bounds = array<i64: 1, 4, 8, 8>}]} {
    %c0 = arith.constant 0 : index
    %c0_0 = arith.constant 0 : index
    %c0_1 = arith.constant 0 : index
    %0 = vector.load %arg1[%c0, %c0_0, %c0_1] : memref<1x8x64xf32, #tpu.memory_space<vmem>>, vector<1x8x64xf32>
    %1 = vector.shape_cast %0 : vector<1x8x64xf32> to vector<8x64xf32>
    %c0_2 = arith.constant 0 : index
    %c0_3 = arith.constant 0 : index
    %2 = vector.load %arg2[%c0_2, %c0_3] : memref<8x64xf32, #tpu.memory_space<vmem>>, vector<8x64xf32>
    %c0_4 = arith.constant 0 : index
    %c0_5 = arith.constant 0 : index
    %3 = vector.load %arg3[%c0_4, %c0_5] : memref<8x64xf32, #tpu.memory_space<vmem>>, vector<8x64xf32>
    %c0_6 = arith.constant 0 : index
    %c0_7 = arith.constant 0 : index
    %4 = vector.load %arg4[%c0_6, %c0_7] : memref<64x64xf32, #tpu.memory_space<vmem>>, vector<64x64xf32>
    %c0_8 = arith.constant 0 : index
    %c0_9 = arith.constant 0 : index
    %5 = vector.load %arg5[%c0_8, %c0_9] : memref<64x32xf32, #tpu.memory_space<vmem>>, vector<64x32xf32>
    %cst = arith.constant dense<0.000000e+00> : vector<8x32xf32>
    %6 = tpu.matmul %1, %5, %cst {dimension_numbers = #tpu.dot_dimension_numbers<[1], [0], [0], [1], [0, 0, 1, 1], [], []>} : vector<8x64xf32>, vector<64x32xf32>, vector<8x32xf32> -> vector<8x32xf32>
    %7 = arith.mulf %6, %6 : vector<8x32xf32>
    %cst_10 = arith.constant dense<0.000000e+00> : vector<8xf32>
    %8 = vector.multi_reduction <add>, %7, %cst_10 [1] : vector<8x32xf32> to vector<8xf32>
    %9 = vector.shape_cast %8 : vector<8xf32> to vector<8x1xf32>
    %cst_11 = arith.constant 3.200000e+01 : f32
    %10 = vector.broadcast %cst_11 : f32 to vector<8x1xf32>
    %11 = arith.divf %9, %10 : vector<8x1xf32>
    %cst_12 = arith.constant 9.99999997E-7 : f32
    %12 = vector.broadcast %cst_12 : f32 to vector<8x1xf32>
    %13 = arith.addf %11, %12 : vector<8x1xf32>
    %14 = math.rsqrt %13 : vector<8x1xf32>
    %15 = vector.broadcast %14 : vector<8x1xf32> to vector<8x32xf32>
    %16 = arith.mulf %6, %15 : vector<8x32xf32>
    %c0_13 = arith.constant 0 : index
    %c0_14 = arith.constant 0 : index
    %17 = vector.load %arg6[%c0_13, %c0_14] : memref<32x128xf32, #tpu.memory_space<vmem>>, vector<32x128xf32>
    %cst_15 = arith.constant dense<0.000000e+00> : vector<8x128xf32>
    %18 = tpu.matmul %16, %17, %cst_15 {dimension_numbers = #tpu.dot_dimension_numbers<[1], [0], [0], [1], [0, 0, 1, 1], [], []>} : vector<8x32xf32>, vector<32x128xf32>, vector<8x128xf32> -> vector<8x128xf32>
    %19 = vector.extract_strided_slice %18 {offsets = [0, 0], sizes = [8, 64], strides = [1, 1]} : vector<8x128xf32> to vector<8x64xf32>
    %20 = vector.extract_strided_slice %18 {offsets = [0, 64], sizes = [8, 64], strides = [1, 1]} : vector<8x128xf32> to vector<8x64xf32>
    %21 = arith.mulf %20, %2 : vector<8x64xf32>
    %cst_16 = arith.constant dense<0.000000e+00> : vector<8x64xf32>
    %22 = tpu.matmul %20, %4, %cst_16 {dimension_numbers = #tpu.dot_dimension_numbers<[1], [0], [0], [1], [0, 0, 1, 1], [], []>} : vector<8x64xf32>, vector<64x64xf32>, vector<8x64xf32> -> vector<8x64xf32>
    %23 = arith.mulf %22, %3 : vector<8x64xf32>
    %24 = arith.addf %21, %23 : vector<8x64xf32>
    %c0_17 = arith.constant 0 : index
    %c0_18 = arith.constant 0 : index
    %25 = vector.load %arg7[%c0_17, %c0_18] : memref<64x48xf32, #tpu.memory_space<vmem>>, vector<64x48xf32>
    %cst_19 = arith.constant dense<0.000000e+00> : vector<8x48xf32>
    %26 = tpu.matmul %1, %25, %cst_19 {dimension_numbers = #tpu.dot_dimension_numbers<[1], [0], [0], [1], [0, 0, 1, 1], [], []>} : vector<8x64xf32>, vector<64x48xf32>, vector<8x48xf32> -> vector<8x48xf32>
    %27 = vector.extract_strided_slice %26 {offsets = [0, 0], sizes = [8, 32], strides = [1, 1]} : vector<8x48xf32> to vector<8x32xf32>
    %28 = arith.mulf %27, %27 : vector<8x32xf32>
    %cst_20 = arith.constant dense<0.000000e+00> : vector<8xf32>
    %29 = vector.multi_reduction <add>, %28, %cst_20 [1] : vector<8x32xf32> to vector<8xf32>
    %30 = vector.shape_cast %29 : vector<8xf32> to vector<8x1xf32>
    %cst_21 = arith.constant 3.200000e+01 : f32
    %31 = vector.broadcast %cst_21 : f32 to vector<8x1xf32>
    %32 = arith.divf %30, %31 : vector<8x1xf32>
    %cst_22 = arith.constant 9.99999997E-7 : f32
    %33 = vector.broadcast %cst_22 : f32 to vector<8x1xf32>
    %34 = arith.addf %32, %33 : vector<8x1xf32>
    %35 = math.rsqrt %34 : vector<8x1xf32>
    %36 = vector.broadcast %35 : vector<8x1xf32> to vector<8x32xf32>
    %37 = arith.mulf %27, %36 : vector<8x32xf32>
    %c0_23 = arith.constant 0 : index
    %c0_24 = arith.constant 0 : index
    %38 = vector.load %arg8[%c0_23, %c0_24] : memref<32x128xf32, #tpu.memory_space<vmem>>, vector<32x128xf32>
    %cst_25 = arith.constant dense<0.000000e+00> : vector<8x128xf32>
    %39 = tpu.matmul %37, %38, %cst_25 {dimension_numbers = #tpu.dot_dimension_numbers<[1], [0], [0], [1], [0, 0, 1, 1], [], []>} : vector<8x32xf32>, vector<32x128xf32>, vector<8x128xf32> -> vector<8x128xf32>
    %40 = vector.extract_strided_slice %39 {offsets = [0, 0], sizes = [8, 64], strides = [1, 1]} : vector<8x128xf32> to vector<8x64xf32>
    %41 = vector.extract_strided_slice %39 {offsets = [0, 64], sizes = [8, 64], strides = [1, 1]} : vector<8x128xf32> to vector<8x64xf32>
    %42 = vector.extract_strided_slice %26 {offsets = [0, 32], sizes = [8, 16], strides = [1, 1]} : vector<8x48xf32> to vector<8x16xf32>
    %43 = vector.extract_strided_slice %2 {offsets = [0, 0], sizes = [8, 16], strides = [1, 1]} : vector<8x64xf32> to vector<8x16xf32>
    %44 = vector.extract_strided_slice %3 {offsets = [0, 0], sizes = [8, 16], strides = [1, 1]} : vector<8x64xf32> to vector<8x16xf32>
    %45 = arith.mulf %42, %43 : vector<8x16xf32>
    %46 = vector.extract_strided_slice %4 {offsets = [0, 0], sizes = [16, 16], strides = [1, 1]} : vector<64x64xf32> to vector<16x16xf32>
    %cst_26 = arith.constant dense<0.000000e+00> : vector<8x16xf32>
    %47 = tpu.matmul %42, %46, %cst_26 {dimension_numbers = #tpu.dot_dimension_numbers<[1], [0], [0], [1], [0, 0, 1, 1], [], []>} : vector<8x16xf32>, vector<16x16xf32>, vector<8x16xf32> -> vector<8x16xf32>
    %48 = arith.mulf %47, %44 : vector<8x16xf32>
    %49 = arith.addf %45, %48 : vector<8x16xf32>
    %50 = tpu.iota {dimensions = array<i32: 0>} : vector<8x8xi32>
    %51 = tpu.iota {dimensions = array<i32: 1>} : vector<8x8xi32>
    %52 = arith.cmpi sle, %51, %50 : vector<8x8xi32>
    %cst_27 = arith.constant 0.000000e+00 : f32
    %cst_28 = arith.constant -3.40282347E+38 : f32
    %53 = vector.broadcast %cst_27 : f32 to vector<8x8xf32>
    %54 = vector.broadcast %cst_28 : f32 to vector<8x8xf32>
    %55 = arith.select %52, %53, %54 : vector<8x8xi1>, vector<8x8xf32>
    %56 = vector.extract_strided_slice %19 {offsets = [0, 0], sizes = [8, 16], strides = [1, 1]} : vector<8x64xf32> to vector<8x16xf32>
    %57 = vector.extract_strided_slice %24 {offsets = [0, 0], sizes = [8, 16], strides = [1, 1]} : vector<8x64xf32> to vector<8x16xf32>
    %58 = vector.extract_strided_slice %40 {offsets = [0, 0], sizes = [8, 16], strides = [1, 1]} : vector<8x64xf32> to vector<8x16xf32>
    %59 = vector.extract_strided_slice %41 {offsets = [0, 0], sizes = [8, 16], strides = [1, 1]} : vector<8x64xf32> to vector<8x16xf32>
    %cst_29 = arith.constant dense<0.000000e+00> : vector<8x8xf32>
    %60 = tpu.matmul %56, %58, %cst_29 {dimension_numbers = #tpu.dot_dimension_numbers<[1], [1], [0], [0], [0, 0, 1, 0], [], []>} : vector<8x16xf32>, vector<8x16xf32>, vector<8x8xf32> -> vector<8x8xf32>
    %cst_30 = arith.constant dense<0.000000e+00> : vector<8x8xf32>
    %61 = tpu.matmul %57, %49, %cst_30 {dimension_numbers = #tpu.dot_dimension_numbers<[1], [1], [0], [0], [0, 0, 1, 0], [], []>} : vector<8x16xf32>, vector<8x16xf32>, vector<8x8xf32> -> vector<8x8xf32>
    %62 = arith.addf %60, %61 : vector<8x8xf32>
    %cst_31 = arith.constant 0.176776692 : f32
    %63 = vector.broadcast %cst_31 : f32 to vector<8x8xf32>
    %64 = arith.mulf %62, %63 : vector<8x8xf32>
    %65 = arith.addf %64, %55 : vector<8x8xf32>
    %cst_32 = arith.constant dense<0xFF800000> : vector<8xf32>
    %66 = vector.multi_reduction <maximumf>, %65, %cst_32 [1] : vector<8x8xf32> to vector<8xf32>
    %67 = vector.shape_cast %66 : vector<8xf32> to vector<8x1xf32>
    %68 = vector.broadcast %67 : vector<8x1xf32> to vector<8x8xf32>
    %69 = arith.subf %65, %68 : vector<8x8xf32>
    %70 = math.exp %69 : vector<8x8xf32>
    %cst_33 = arith.constant dense<0.000000e+00> : vector<8xf32>
    %71 = vector.multi_reduction <add>, %70, %cst_33 [1] : vector<8x8xf32> to vector<8xf32>
    %72 = vector.shape_cast %71 : vector<8xf32> to vector<8x1xf32>
    %73 = tpu.reciprocal %72 : vector<8x1xf32> -> vector<8x1xf32>
    %74 = vector.broadcast %73 : vector<8x1xf32> to vector<8x8xf32>
    %75 = arith.mulf %70, %74 : vector<8x8xf32>
    %cst_34 = arith.constant dense<0.000000e+00> : vector<8x16xf32>
    %76 = tpu.matmul %75, %59, %cst_34 {dimension_numbers = #tpu.dot_dimension_numbers<[1], [0], [0], [1], [0, 0, 1, 1], [], []>} : vector<8x8xf32>, vector<8x16xf32>, vector<8x16xf32> -> vector<8x16xf32>
    %c0_35 = arith.constant 0 : index
    %c0_36 = arith.constant 0 : index
    %77 = vector.load %arg12[%c0_35, %c0_36] : memref<8x64xf32, #tpu.memory_space<vmem>>, vector<8x16xf32>
    tpu.vector_store %arg12[%c0_35, %c0_36], %76 {strides = array<i32>} : memref<8x64xf32, #tpu.memory_space<vmem>>, vector<8x16xf32>,
    %c0_37 = arith.constant 0 : index
    %c0_38 = arith.constant 0 : index
    %c0_39 = arith.constant 0 : index
    %c0_40 = arith.constant 0 : index
    %78 = vector.load %arg11[%c0_37, %c0_38, %c0_39, %c0_40] : memref<1x4x8x8xf32, #tpu.memory_space<vmem>>, vector<1x1x8x8xf32>
    %79 = vector.shape_cast %78 : vector<1x1x8x8xf32> to vector<8x8xf32>
    %80 = vector.shape_cast %75 : vector<8x8xf32> to vector<1x1x8x8xf32>
    tpu.vector_store %arg11[%c0_37, %c0_38, %c0_39, %c0_40], %80 {strides = array<i32>} : memref<1x4x8x8xf32, #tpu.memory_space<vmem>>, vector<1x1x8x8xf32>,
    %81 = vector.extract_strided_slice %19 {offsets = [0, 16], sizes = [8, 16], strides = [1, 1]} : vector<8x64xf32> to vector<8x16xf32>
    %82 = vector.extract_strided_slice %24 {offsets = [0, 16], sizes = [8, 16], strides = [1, 1]} : vector<8x64xf32> to vector<8x16xf32>
    %83 = vector.extract_strided_slice %40 {offsets = [0, 16], sizes = [8, 16], strides = [1, 1]} : vector<8x64xf32> to vector<8x16xf32>
    %84 = vector.extract_strided_slice %41 {offsets = [0, 16], sizes = [8, 16], strides = [1, 1]} : vector<8x64xf32> to vector<8x16xf32>
    %cst_41 = arith.constant dense<0.000000e+00> : vector<8x8xf32>
    %85 = tpu.matmul %81, %83, %cst_41 {dimension_numbers = #tpu.dot_dimension_numbers<[1], [1], [0], [0], [0, 0, 1, 0], [], []>} : vector<8x16xf32>, vector<8x16xf32>, vector<8x8xf32> -> vector<8x8xf32>
    %cst_42 = arith.constant dense<0.000000e+00> : vector<8x8xf32>
    %86 = tpu.matmul %82, %49, %cst_42 {dimension_numbers = #tpu.dot_dimension_numbers<[1], [1], [0], [0], [0, 0, 1, 0], [], []>} : vector<8x16xf32>, vector<8x16xf32>, vector<8x8xf32> -> vector<8x8xf32>
    %87 = arith.addf %85, %86 : vector<8x8xf32>
    %cst_43 = arith.constant 0.176776692 : f32
    %88 = vector.broadcast %cst_43 : f32 to vector<8x8xf32>
    %89 = arith.mulf %87, %88 : vector<8x8xf32>
    %90 = arith.addf %89, %55 : vector<8x8xf32>
    %cst_44 = arith.constant dense<0xFF800000> : vector<8xf32>
    %91 = vector.multi_reduction <maximumf>, %90, %cst_44 [1] : vector<8x8xf32> to vector<8xf32>
    %92 = vector.shape_cast %91 : vector<8xf32> to vector<8x1xf32>
    %93 = vector.broadcast %92 : vector<8x1xf32> to vector<8x8xf32>
    %94 = arith.subf %90, %93 : vector<8x8xf32>
    %95 = math.exp %94 : vector<8x8xf32>
    %cst_45 = arith.constant dense<0.000000e+00> : vector<8xf32>
    %96 = vector.multi_reduction <add>, %95, %cst_45 [1] : vector<8x8xf32> to vector<8xf32>
    %97 = vector.shape_cast %96 : vector<8xf32> to vector<8x1xf32>
    %98 = tpu.reciprocal %97 : vector<8x1xf32> -> vector<8x1xf32>
    %99 = vector.broadcast %98 : vector<8x1xf32> to vector<8x8xf32>
    %100 = arith.mulf %95, %99 : vector<8x8xf32>
    %cst_46 = arith.constant dense<0.000000e+00> : vector<8x16xf32>
    %101 = tpu.matmul %100, %84, %cst_46 {dimension_numbers = #tpu.dot_dimension_numbers<[1], [0], [0], [1], [0, 0, 1, 1], [], []>} : vector<8x8xf32>, vector<8x16xf32>, vector<8x16xf32> -> vector<8x16xf32>
    %c0_47 = arith.constant 0 : index
    %c16 = arith.constant 16 : index
    %102 = vector.load %arg12[%c0_47, %c16] : memref<8x64xf32, #tpu.memory_space<vmem>>, vector<8x16xf32>
    tpu.vector_store %arg12[%c0_47, %c16], %101 {strides = array<i32>} : memref<8x64xf32, #tpu.memory_space<vmem>>, vector<8x16xf32>,
    %c0_48 = arith.constant 0 : index
    %c1 = arith.constant 1 : index
    %c0_49 = arith.constant 0 : index
    %c0_50 = arith.constant 0 : index
    %103 = vector.load %arg11[%c0_48, %c1, %c0_49, %c0_50] : memref<1x4x8x8xf32, #tpu.memory_space<vmem>>, vector<1x1x8x8xf32>
    %104 = vector.shape_cast %103 : vector<1x1x8x8xf32> to vector<8x8xf32>
    %105 = vector.shape_cast %100 : vector<8x8xf32> to vector<1x1x8x8xf32>
    tpu.vector_store %arg11[%c0_48, %c1, %c0_49, %c0_50], %105 {strides = array<i32>} : memref<1x4x8x8xf32, #tpu.memory_space<vmem>>, vector<1x1x8x8xf32>,
    %106 = vector.extract_strided_slice %19 {offsets = [0, 32], sizes = [8, 16], strides = [1, 1]} : vector<8x64xf32> to vector<8x16xf32>
    %107 = vector.extract_strided_slice %24 {offsets = [0, 32], sizes = [8, 16], strides = [1, 1]} : vector<8x64xf32> to vector<8x16xf32>
    %108 = vector.extract_strided_slice %40 {offsets = [0, 32], sizes = [8, 16], strides = [1, 1]} : vector<8x64xf32> to vector<8x16xf32>
    %109 = vector.extract_strided_slice %41 {offsets = [0, 32], sizes = [8, 16], strides = [1, 1]} : vector<8x64xf32> to vector<8x16xf32>
    %cst_51 = arith.constant dense<0.000000e+00> : vector<8x8xf32>
    %110 = tpu.matmul %106, %108, %cst_51 {dimension_numbers = #tpu.dot_dimension_numbers<[1], [1], [0], [0], [0, 0, 1, 0], [], []>} : vector<8x16xf32>, vector<8x16xf32>, vector<8x8xf32> -> vector<8x8xf32>
    %cst_52 = arith.constant dense<0.000000e+00> : vector<8x8xf32>
    %111 = tpu.matmul %107, %49, %cst_52 {dimension_numbers = #tpu.dot_dimension_numbers<[1], [1], [0], [0], [0, 0, 1, 0], [], []>} : vector<8x16xf32>, vector<8x16xf32>, vector<8x8xf32> -> vector<8x8xf32>
    %112 = arith.addf %110, %111 : vector<8x8xf32>
    %cst_53 = arith.constant 0.176776692 : f32
    %113 = vector.broadcast %cst_53 : f32 to vector<8x8xf32>
    %114 = arith.mulf %112, %113 : vector<8x8xf32>
    %115 = arith.addf %114, %55 : vector<8x8xf32>
    %cst_54 = arith.constant dense<0xFF800000> : vector<8xf32>
    %116 = vector.multi_reduction <maximumf>, %115, %cst_54 [1] : vector<8x8xf32> to vector<8xf32>
    %117 = vector.shape_cast %116 : vector<8xf32> to vector<8x1xf32>
    %118 = vector.broadcast %117 : vector<8x1xf32> to vector<8x8xf32>
    %119 = arith.subf %115, %118 : vector<8x8xf32>
    %120 = math.exp %119 : vector<8x8xf32>
    %cst_55 = arith.constant dense<0.000000e+00> : vector<8xf32>
    %121 = vector.multi_reduction <add>, %120, %cst_55 [1] : vector<8x8xf32> to vector<8xf32>
    %122 = vector.shape_cast %121 : vector<8xf32> to vector<8x1xf32>
    %123 = tpu.reciprocal %122 : vector<8x1xf32> -> vector<8x1xf32>
    %124 = vector.broadcast %123 : vector<8x1xf32> to vector<8x8xf32>
    %125 = arith.mulf %120, %124 : vector<8x8xf32>
    %cst_56 = arith.constant dense<0.000000e+00> : vector<8x16xf32>
    %126 = tpu.matmul %125, %109, %cst_56 {dimension_numbers = #tpu.dot_dimension_numbers<[1], [0], [0], [1], [0, 0, 1, 1], [], []>} : vector<8x8xf32>, vector<8x16xf32>, vector<8x16xf32> -> vector<8x16xf32>
    %c0_57 = arith.constant 0 : index
    %c32 = arith.constant 32 : index
    %127 = vector.load %arg12[%c0_57, %c32] : memref<8x64xf32, #tpu.memory_space<vmem>>, vector<8x16xf32>
    tpu.vector_store %arg12[%c0_57, %c32], %126 {strides = array<i32>} : memref<8x64xf32, #tpu.memory_space<vmem>>, vector<8x16xf32>,
    %c0_58 = arith.constant 0 : index
    %c2 = arith.constant 2 : index
    %c0_59 = arith.constant 0 : index
    %c0_60 = arith.constant 0 : index
    %128 = vector.load %arg11[%c0_58, %c2, %c0_59, %c0_60] : memref<1x4x8x8xf32, #tpu.memory_space<vmem>>, vector<1x1x8x8xf32>
    %129 = vector.shape_cast %128 : vector<1x1x8x8xf32> to vector<8x8xf32>
    %130 = vector.shape_cast %125 : vector<8x8xf32> to vector<1x1x8x8xf32>
    tpu.vector_store %arg11[%c0_58, %c2, %c0_59, %c0_60], %130 {strides = array<i32>} : memref<1x4x8x8xf32, #tpu.memory_space<vmem>>, vector<1x1x8x8xf32>,
    %131 = vector.extract_strided_slice %19 {offsets = [0, 48], sizes = [8, 16], strides = [1, 1]} : vector<8x64xf32> to vector<8x16xf32>
    %132 = vector.extract_strided_slice %24 {offsets = [0, 48], sizes = [8, 16], strides = [1, 1]} : vector<8x64xf32> to vector<8x16xf32>
    %133 = vector.extract_strided_slice %40 {offsets = [0, 48], sizes = [8, 16], strides = [1, 1]} : vector<8x64xf32> to vector<8x16xf32>
    %134 = vector.extract_strided_slice %41 {offsets = [0, 48], sizes = [8, 16], strides = [1, 1]} : vector<8x64xf32> to vector<8x16xf32>
    %cst_61 = arith.constant dense<0.000000e+00> : vector<8x8xf32>
    %135 = tpu.matmul %131, %133, %cst_61 {dimension_numbers = #tpu.dot_dimension_numbers<[1], [1], [0], [0], [0, 0, 1, 0], [], []>} : vector<8x16xf32>, vector<8x16xf32>, vector<8x8xf32> -> vector<8x8xf32>
    %cst_62 = arith.constant dense<0.000000e+00> : vector<8x8xf32>
    %136 = tpu.matmul %132, %49, %cst_62 {dimension_numbers = #tpu.dot_dimension_numbers<[1], [1], [0], [0], [0, 0, 1, 0], [], []>} : vector<8x16xf32>, vector<8x16xf32>, vector<8x8xf32> -> vector<8x8xf32>
    %137 = arith.addf %135, %136 : vector<8x8xf32>
    %cst_63 = arith.constant 0.176776692 : f32
    %138 = vector.broadcast %cst_63 : f32 to vector<8x8xf32>
    %139 = arith.mulf %137, %138 : vector<8x8xf32>
    %140 = arith.addf %139, %55 : vector<8x8xf32>
    %cst_64 = arith.constant dense<0xFF800000> : vector<8xf32>
    %141 = vector.multi_reduction <maximumf>, %140, %cst_64 [1] : vector<8x8xf32> to vector<8xf32>
    %142 = vector.shape_cast %141 : vector<8xf32> to vector<8x1xf32>
    %143 = vector.broadcast %142 : vector<8x1xf32> to vector<8x8xf32>
    %144 = arith.subf %140, %143 : vector<8x8xf32>
    %145 = math.exp %144 : vector<8x8xf32>
    %cst_65 = arith.constant dense<0.000000e+00> : vector<8xf32>
    %146 = vector.multi_reduction <add>, %145, %cst_65 [1] : vector<8x8xf32> to vector<8xf32>
    %147 = vector.shape_cast %146 : vector<8xf32> to vector<8x1xf32>
    %148 = tpu.reciprocal %147 : vector<8x1xf32> -> vector<8x1xf32>
    %149 = vector.broadcast %148 : vector<8x1xf32> to vector<8x8xf32>
    %150 = arith.mulf %145, %149 : vector<8x8xf32>
    %cst_66 = arith.constant dense<0.000000e+00> : vector<8x16xf32>
    %151 = tpu.matmul %150, %134, %cst_66 {dimension_numbers = #tpu.dot_dimension_numbers<[1], [0], [0], [1], [0, 0, 1, 1], [], []>} : vector<8x8xf32>, vector<8x16xf32>, vector<8x16xf32> -> vector<8x16xf32>
    %c0_67 = arith.constant 0 : index
    %c48 = arith.constant 48 : index
    %152 = vector.load %arg12[%c0_67, %c48] : memref<8x64xf32, #tpu.memory_space<vmem>>, vector<8x16xf32>
    tpu.vector_store %arg12[%c0_67, %c48], %151 {strides = array<i32>} : memref<8x64xf32, #tpu.memory_space<vmem>>, vector<8x16xf32>,
    %c0_68 = arith.constant 0 : index
    %c3 = arith.constant 3 : index
    %c0_69 = arith.constant 0 : index
    %c0_70 = arith.constant 0 : index
    %153 = vector.load %arg11[%c0_68, %c3, %c0_69, %c0_70] : memref<1x4x8x8xf32, #tpu.memory_space<vmem>>, vector<1x1x8x8xf32>
    %154 = vector.shape_cast %153 : vector<1x1x8x8xf32> to vector<8x8xf32>
    %155 = vector.shape_cast %150 : vector<8x8xf32> to vector<1x1x8x8xf32>
    tpu.vector_store %arg11[%c0_68, %c3, %c0_69, %c0_70], %155 {strides = array<i32>} : memref<1x4x8x8xf32, #tpu.memory_space<vmem>>, vector<1x1x8x8xf32>,
    %c0_71 = arith.constant 0 : index
    %c0_72 = arith.constant 0 : index
    %156 = vector.load %arg12[%c0_71, %c0_72] : memref<8x64xf32, #tpu.memory_space<vmem>>, vector<8x64xf32>
    %c0_73 = arith.constant 0 : index
    %c0_74 = arith.constant 0 : index
    %157 = vector.load %arg9[%c0_73, %c0_74] : memref<64x64xf32, #tpu.memory_space<vmem>>, vector<64x64xf32>
    %cst_75 = arith.constant dense<0.000000e+00> : vector<8x64xf32>
    %158 = tpu.matmul %156, %157, %cst_75 {dimension_numbers = #tpu.dot_dimension_numbers<[1], [0], [0], [1], [0, 0, 1, 1], [], []>} : vector<8x64xf32>, vector<64x64xf32>, vector<8x64xf32> -> vector<8x64xf32>
    %c0_76 = arith.constant 0 : index
    %c0_77 = arith.constant 0 : index
    %c0_78 = arith.constant 0 : index
    %159 = vector.load %arg10[%c0_76, %c0_77, %c0_78] : memref<1x8x64xf32, #tpu.memory_space<vmem>>, vector<1x8x64xf32>
    %160 = vector.shape_cast %159 : vector<1x8x64xf32> to vector<8x64xf32>
    %161 = vector.shape_cast %158 : vector<8x64xf32> to vector<1x8x64xf32>
    tpu.vector_store %arg10[%c0_76, %c0_77, %c0_78], %161 {strides = array<i32>} : memref<1x8x64xf32, #tpu.memory_space<vmem>>, vector<1x8x64xf32>,
    return
  }
  func.func @transform_0(%arg0: i32) -> (i32, i32, i32) {
    %c0_i32 = arith.constant 0 : i32
    %c0_i32_0 = arith.constant 0 : i32
    %c0_i32_1 = arith.constant 0 : i32
    return %arg0, %c0_i32, %c0_i32_0 : i32, i32, i32
  }
  func.func @transform_1(%arg0: i32) -> (i32, i32) {
    %c0_i32 = arith.constant 0 : i32
    %c0_i32_0 = arith.constant 0 : i32
    %c0_i32_1 = arith.constant 0 : i32
    return %c0_i32, %c0_i32_0 : i32, i32
  }
  func.func @transform_2(%arg0: i32) -> (i32, i32) {
    %c0_i32 = arith.constant 0 : i32
    %c0_i32_0 = arith.constant 0 : i32
    %c0_i32_1 = arith.constant 0 : i32
    return %c0_i32, %c0_i32_0 : i32, i32
  }
  func.func @transform_3(%arg0: i32) -> (i32, i32) {
    %c0_i32 = arith.constant 0 : i32
    %c0_i32_0 = arith.constant 0 : i32
    %c0_i32_1 = arith.constant 0 : i32
    return %c0_i32, %c0_i32_0 : i32, i32
  }
  func.func @transform_4(%arg0: i32) -> (i32, i32) {
    %c0_i32 = arith.constant 0 : i32
    %c0_i32_0 = arith.constant 0 : i32
    %c0_i32_1 = arith.constant 0 : i32
    return %c0_i32, %c0_i32_0 : i32, i32
  }
  func.func @transform_5(%arg0: i32) -> (i32, i32) {
    %c0_i32 = arith.constant 0 : i32
    %c0_i32_0 = arith.constant 0 : i32
    %c0_i32_1 = arith.constant 0 : i32
    return %c0_i32, %c0_i32_0 : i32, i32
  }
  func.func @transform_6(%arg0: i32) -> (i32, i32) {
    %c0_i32 = arith.constant 0 : i32
    %c0_i32_0 = arith.constant 0 : i32
    %c0_i32_1 = arith.constant 0 : i32
    return %c0_i32, %c0_i32_0 : i32, i32
  }
  func.func @transform_7(%arg0: i32) -> (i32, i32) {
    %c0_i32 = arith.constant 0 : i32
    %c0_i32_0 = arith.constant 0 : i32
    %c0_i32_1 = arith.constant 0 : i32
    return %c0_i32, %c0_i32_0 : i32, i32
  }
  func.func @transform_8(%arg0: i32) -> (i32, i32) {
    %c0_i32 = arith.constant 0 : i32
    %c0_i32_0 = arith.constant 0 : i32
    %c0_i32_1 = arith.constant 0 : i32
    return %c0_i32, %c0_i32_0 : i32, i32
  }
  func.func @transform_9(%arg0: i32) -> (i32, i32, i32) {
    %c0_i32 = arith.constant 0 : i32
    %c0_i32_0 = arith.constant 0 : i32
    %c0_i32_1 = arith.constant 0 : i32
    return %arg0, %c0_i32, %c0_i32_0 : i32, i32, i32
  }
  func.func @transform_10(%arg0: i32) -> (i32, i32, i32, i32) {
    %c0_i32 = arith.constant 0 : i32
    %c0_i32_0 = arith.constant 0 : i32
    %c0_i32_1 = arith.constant 0 : i32
    %c0_i32_2 = arith.constant 0 : i32
    return %arg0, %c0_i32, %c0_i32_0, %c0_i32_1 : i32, i32, i32, i32
  }
}

</mosaic_0001>

<llo_original>
// kernel: tpu_custom_call.1
$region0: #{tpu_custom_call.1}
  #allocation0 [shape = 'u32[]', space=smem, size = 0x4, offset = 0x4, fixed_abs, tag = 'smem constant byte address 0x4 - core index']
  #allocation1 [shape = 'u32[144,128]{1,0:T(1,128)}', space=vmem, size = 0x12000, scoped, tag = 'internal scratch']
  #allocation2 [shape = 'f32[8,64]{1,0:T(8,128)}', space=vmem, size = 0x1000, scoped, tag = 'scratch operand']
  %s0 = inlined_call_operand.hbm [shape: f32[2,8,64], index: 0, kind: input, shape index: {}]
  %s1 = inlined_call_operand.hbm [shape: f32[8,64], index: 1, kind: input, shape index: {}]
  %s2 = inlined_call_operand.hbm [shape: f32[8,64], index: 2, kind: input, shape index: {}]
  %s3 = inlined_call_operand.vmem [shape: f32[64,64], index: 3, kind: input, shape index: {}]
  %s4 = inlined_call_operand.vmem [shape: f32[64,32], index: 4, kind: input, shape index: {}]
  %s5 = inlined_call_operand.vmem [shape: f32[32,128], index: 5, kind: input, shape index: {}]
  %s6 = inlined_call_operand.vmem [shape: f32[64,48], index: 6, kind: input, shape index: {}]
  %s7 = inlined_call_operand.hbm [shape: f32[32,128], index: 7, kind: input, shape index: {}]
  %s8 = inlined_call_operand.vmem [shape: f32[64,64], index: 8, kind: input, shape index: {}]
  %s9 = inlined_call_operand.hbm [shape: f32[2,8,64], index: 9, kind: output, shape index: {0}]
  %s10 = inlined_call_operand.hbm [shape: f32[2,4,8,8], index: 10, kind: output, shape index: {1}]
  %11 = xla_tuple %s9, %s10
  %s12 = sld [smem:[#allocation0]]
  $region93: #{tpu_custom_call.1} parent=0
    _
  %s14 = ssub.s32 1, %s12
  %s15 = scalar_select 0, %s14, %s12
  $region1: #{tpu_custom_call.1} parent=0
    #allocation3 [shape = 'u8[8192]{0}', space=vmem, size = 0x2000, scoped, tag = 'input window, operand 0']
    #allocation4 [shape = 's32[2]{0}', space=sflag, size = 0x8, scoped, tag = 'scoped memory for tpu_custom_call.1']
    #allocation5 [shape = 's32[2]{0}', space=sflag, size = 0x8, scoped, tag = 'scoped memory for tpu_custom_call.1']
    #allocation6 [shape = 'u8[4096]{0}', space=vmem, size = 0x1000, scoped, tag = 'input window, operand 1, single buffered']
    #allocation7 [shape = 's32[1]{0}', space=sflag, size = 0x4, scoped, tag = 'scoped memory for tpu_custom_call.1']
    #allocation8 [shape = 'u8[4096]{0}', space=vmem, size = 0x1000, scoped, tag = 'input window, operand 2, single buffered']
    #allocation9 [shape = 'u8[16384]{0}', space=vmem, size = 0x4000, scoped, tag = 'input window, operand 7, single buffered']
    #allocation10 [shape = 's32[1]{0}', space=sflag, size = 0x4, scoped, tag = 'scoped memory for tpu_custom_call.1']
    #allocation11 [shape = 'u8[8192]{0}', space=vmem, size = 0x2000, scoped, tag = 'output window, operand 0']
    #allocation12 [shape = 'u8[32768]{0}', space=vmem, size = 0x8000, scoped, tag = 'output window, operand 1']
    #allocation13 [shape = 's32[2]{0}', space=sflag, size = 0x8, scoped, tag = 'scoped memory for tpu_custom_call.1']
    %16 = vsyncpa [#allocation4], 0
    %s17 = scalar_lea.sflag [#allocation4], 1
    %18 = vsyncpa %s17, 0
    %19 = vsyncpa [#allocation7], 0
    %20 = vsyncpa [#allocation10], 0
    %21 = vsyncpa [#allocation5], 0
    %s22 = scalar_lea.sflag [#allocation5], 1
    %23 = vsyncpa %s22, 0
    %24 = vsyncpa [#allocation13], 0
    %s25 = scalar_lea.sflag [#allocation13], 1
    %26 = vsyncpa %s25, 0
    loop: start=0, step=1, limit=4
    $region2: #{tpu_custom_call.1} parent=1 // loop_pre_header
      _
    $region3: #{tpu_custom_call.1} parent=1 // loop_header
      %s28 = sphi 0, %s32
      %p29 = scmp.ge.s32.totalorder %s28, 4
      %s38 = sphi 0, %s40
      %s41 = sphi 0, %s38
      %s42 = sphi 0, %s41
      %s58 = sphi 0, %s42
      %s62 = sphi 0, %s62
      %s64 = sphi 0, %s62
      %s65 = sphi 0, %s64
      %s79 = sphi 0, %s65
      %s83 = sphi 0, %s83
      %s85 = sphi 0, %s83
      %s86 = sphi 0, %s85
      %s100 = sphi 0, %s86
      %s104 = sphi 0, %s104
      %s106 = sphi 0, %s104
      %s107 = sphi 0, %s106
      %s121 = sphi 0, %s107
      %s125 = sphi 0, %s125
      %s127 = sphi 0, %s125
      %s128 = sphi 0, %s127
      %s142 = sphi 0, %s128
      %s146 = sphi 0, %s146
      %s148 = sphi 0, %s146
      %s149 = sphi 0, %s148
      %s163 = sphi 0, %s149
      %s167 = sphi 0, %s167
      %s169 = sphi 0, %s167
      %s170 = sphi 0, %s169
      %s184 = sphi 0, %s170
      %s188 = sphi 0, %s188
      %s190 = sphi 0, %s188
      %s191 = sphi 0, %s190
      %s205 = sphi 0, %s191
      %s209 = sphi 0, %s209
      %s211 = sphi 0, %s209
      %s212 = sphi 0, %s211
      %s226 = sphi 0, %s212
      %s232 = sphi 0, %s234
      %s235 = sphi 0, %s232
      %s236 = sphi 0, %s235
      %s252 = sphi 0, %s236
      %s258 = sphi 0, %s260
      %s261 = sphi 0, %s258
      %s262 = sphi 0, %s261
      %s278 = sphi 0, %s262
    $region4: #{tpu_custom_call.1} parent=1 // loop_header_branch
      %31 = sbr.rel (%p29) target = $region8
    $region5: #{tpu_custom_call.1} parent=1 // loop_body
      %s33 = ssub.s32 %s28, 1
      %s34 = ssub.s32 %s28, 2
      %s35 = sadd.s32 %s28, 1
      %s36 = ssub.s32 %s28, %s35
      %p37 = scmp.eq.s32.totalorder %s36, 0
      %s39 = sadd.s32 %s38, 1
      %s40 = scalar_select %p37, %s38, %s39
      %p43 = pneg %p37
      %p44 = scmp.eq.s32.totalorder %s28, 1
      %p45 = por %p43, %p44
      %p46 = scmp.ne.s32.totalorder %s38, %s41
      %p47 = scmp.eq.s32.totalorder %s28, 0
      %p48 = por %p46, %p47
      %p49 = scmp.ne.s32.totalorder %s38, %s41
      %p50 = scmp.eq.s32.totalorder %s33, 1
      %p51 = por %p49, %p50
      %p52 = scmp.ne.s32.totalorder %s41, %s42
      %p53 = scmp.eq.s32.totalorder %s33, 0
      %p54 = por %p52, %p53
      %p55 = scmp.ne.s32.totalorder %s41, %s42
      %p56 = scmp.eq.s32.totalorder %s34, 1
      %p57 = por %p55, %p56
      %p59 = scmp.ne.s32.totalorder %s42, %s58
      %p60 = scmp.eq.s32.totalorder %s34, 0
      %p61 = por %p59, %p60
      %s63 = sadd.s32 %s62, 1
      %p66 = scmp.eq.s32.totalorder %s28, 1
      %p67 = scmp.ne.s32.totalorder %s62, %s64
      %p68 = scmp.eq.s32.totalorder %s28, 0
      %p69 = por %p67, %p68
      %p70 = scmp.ne.s32.totalorder %s62, %s64
      %p71 = scmp.eq.s32.totalorder %s33, 1
      %p72 = por %p70, %p71
      %p73 = scmp.ne.s32.totalorder %s64, %s65
      %p74 = scmp.eq.s32.totalorder %s33, 0
      %p75 = por %p73, %p74
      %p76 = scmp.ne.s32.totalorder %s64, %s65
      %p77 = scmp.eq.s32.totalorder %s34, 1
      %p78 = por %p76, %p77
      %p80 = scmp.ne.s32.totalorder %s65, %s79
      %p81 = scmp.eq.s32.totalorder %s34, 0
      %p82 = por %p80, %p81
      %s84 = sadd.s32 %s83, 1
      %p87 = scmp.eq.s32.totalorder %s28, 1
      %p88 = scmp.ne.s32.totalorder %s83, %s85
      %p89 = scmp.eq.s32.totalorder %s28, 0
      %p90 = por %p88, %p89
      %p91 = scmp.ne.s32.totalorder %s83, %s85
      %p92 = scmp.eq.s32.totalorder %s33, 1
      %p93 = por %p91, %p92
      %p94 = scmp.ne.s32.totalorder %s85, %s86
      %p95 = scmp.eq.s32.totalorder %s33, 0
      %p96 = por %p94, %p95
      %p97 = scmp.ne.s32.totalorder %s85, %s86
      %p98 = scmp.eq.s32.totalorder %s34, 1
      %p99 = por %p97, %p98
      %p101 = scmp.ne.s32.totalorder %s86, %s100
      %p102 = scmp.eq.s32.totalorder %s34, 0
      %p103 = por %p101, %p102
      %s105 = sadd.s32 %s104, 1
      %p108 = scmp.eq.s32.totalorder %s28, 1
      %p109 = scmp.ne.s32.totalorder %s104, %s106
      %p110 = scmp.eq.s32.totalorder %s28, 0
      %p111 = por %p109, %p110
      %p112 = scmp.ne.s32.totalorder %s104, %s106
      %p113 = scmp.eq.s32.totalorder %s33, 1
      %p114 = por %p112, %p113
      %p115 = scmp.ne.s32.totalorder %s106, %s107
      %p116 = scmp.eq.s32.totalorder %s33, 0
      %p117 = por %p115, %p116
      %p118 = scmp.ne.s32.totalorder %s106, %s107
      %p119 = scmp.eq.s32.totalorder %s34, 1
      %p120 = por %p118, %p119
      %p122 = scmp.ne.s32.totalorder %s107, %s121
      %p123 = scmp.eq.s32.totalorder %s34, 0
      %p124 = por %p122, %p123
      %s126 = sadd.s32 %s125, 1
      %p129 = scmp.eq.s32.totalorder %s28, 1
      %p130 = scmp.ne.s32.totalorder %s125, %s127
      %p131 = scmp.eq.s32.totalorder %s28, 0
      %p132 = por %p130, %p131
      %p133 = scmp.ne.s32.totalorder %s125, %s127
      %p134 = scmp.eq.s32.totalorder %s33, 1
      %p135 = por %p133, %p134
      %p136 = scmp.ne.s32.totalorder %s127, %s128
      %p137 = scmp.eq.s32.totalorder %s33, 0
      %p138 = por %p136, %p137
      %p139 = scmp.ne.s32.totalorder %s127, %s128
      %p140 = scmp.eq.s32.totalorder %s34, 1
      %p141 = por %p139, %p140
      %p143 = scmp.ne.s32.totalorder %s128, %s142
      %p144 = scmp.eq.s32.totalorder %s34, 0
      %p145 = por %p143, %p144
      %s147 = sadd.s32 %s146, 1
      %p150 = scmp.eq.s32.totalorder %s28, 1
      %p151 = scmp.ne.s32.totalorder %s146, %s148
      %p152 = scmp.eq.s32.totalorder %s28, 0
      %p153 = por %p151, %p152
      %p154 = scmp.ne.s32.totalorder %s146, %s148
      %p155 = scmp.eq.s32.totalorder %s33, 1
      %p156 = por %p154, %p155
      %p157 = scmp.ne.s32.totalorder %s148, %s149
      %p158 = scmp.eq.s32.totalorder %s33, 0
      %p159 = por %p157, %p158
      %p160 = scmp.ne.s32.totalorder %s148, %s149
      %p161 = scmp.eq.s32.totalorder %s34, 1
      %p162 = por %p160, %p161
      %p164 = scmp.ne.s32.totalorder %s149, %s163
      %p165 = scmp.eq.s32.totalorder %s34, 0
      %p166 = por %p164, %p165
      %s168 = sadd.s32 %s167, 1
      %p171 = scmp.eq.s32.totalorder %s28, 1
      %p172 = scmp.ne.s32.totalorder %s167, %s169
      %p173 = scmp.eq.s32.totalorder %s28, 0
      %p174 = por %p172, %p173
      %p175 = scmp.ne.s32.totalorder %s167, %s169
      %p176 = scmp.eq.s32.totalorder %s33, 1
      %p177 = por %p175, %p176
      %p178 = scmp.ne.s32.totalorder %s169, %s170
      %p179 = scmp.eq.s32.totalorder %s33, 0
      %p180 = por %p178, %p179
      %p181 = scmp.ne.s32.totalorder %s169, %s170
      %p182 = scmp.eq.s32.totalorder %s34, 1
      %p183 = por %p181, %p182
      %p185 = scmp.ne.s32.totalorder %s170, %s184
      %p186 = scmp.eq.s32.totalorder %s34, 0
      %p187 = por %p185, %p186
      %s189 = sadd.s32 %s188, 1
      %p192 = scmp.eq.s32.totalorder %s28, 1
      %p193 = scmp.ne.s32.totalorder %s188, %s190
      %p194 = scmp.eq.s32.totalorder %s28, 0
      %p195 = por %p193, %p194
      %p196 = scmp.ne.s32.totalorder %s188, %s190
      %p197 = scmp.eq.s32.totalorder %s33, 1
      %p198 = por %p196, %p197
      %p199 = scmp.ne.s32.totalorder %s190, %s191
      %p200 = scmp.eq.s32.totalorder %s33, 0
      %p201 = por %p199, %p200
      %p202 = scmp.ne.s32.totalorder %s190, %s191
      %p203 = scmp.eq.s32.totalorder %s34, 1
      %p204 = por %p202, %p203
      %p206 = scmp.ne.s32.totalorder %s191, %s205
      %p207 = scmp.eq.s32.totalorder %s34, 0
      %p208 = por %p206, %p207
      %s210 = sadd.s32 %s209, 1
      %p213 = scmp.eq.s32.totalorder %s28, 1
      %p214 = scmp.ne.s32.totalorder %s209, %s211
      %p215 = scmp.eq.s32.totalorder %s28, 0
      %p216 = por %p214, %p215
      %p217 = scmp.ne.s32.totalorder %s209, %s211
      %p218 = scmp.eq.s32.totalorder %s33, 1
      %p219 = por %p217, %p218
      %p220 = scmp.ne.s32.totalorder %s211, %s212
      %p221 = scmp.eq.s32.totalorder %s33, 0
      %p222 = por %p220, %p221
      %p223 = scmp.ne.s32.totalorder %s211, %s212
      %p224 = scmp.eq.s32.totalorder %s34, 1
      %p225 = por %p223, %p224
      %p227 = scmp.ne.s32.totalorder %s212, %s226
      %p228 = scmp.eq.s32.totalorder %s34, 0
      %p229 = por %p227, %p228
      %s230 = ssub.s32 %s28, %s35
      %p231 = scmp.eq.s32.totalorder %s230, 0
      %s233 = sadd.s32 %s232, 1
      %s234 = scalar_select %p231, %s232, %s233
      %p237 = pneg %p231
      %p238 = scmp.eq.s32.totalorder %s28, 1
      %p239 = por %p237, %p238
      %p240 = scmp.ne.s32.totalorder %s232, %s235
      %p241 = scmp.eq.s32.totalorder %s28, 0
      %p242 = por %p240, %p241
      %p243 = scmp.ne.s32.totalorder %s232, %s235
      %p244 = scmp.eq.s32.totalorder %s33, 1
      %p245 = por %p243, %p244
      %p246 = scmp.ne.s32.totalorder %s235, %s236
      %p247 = scmp.eq.s32.totalorder %s33, 0
      %p248 = por %p246, %p247
      %p249 = scmp.ne.s32.totalorder %s235, %s236
      %p250 = scmp.eq.s32.totalorder %s34, 1
      %p251 = por %p249, %p250
      %p253 = scmp.ne.s32.totalorder %s236, %s252
      %p254 = scmp.eq.s32.totalorder %s34, 0
      %p255 = por %p253, %p254
      %s256 = ssub.s32 %s28, %s35
      %p257 = scmp.eq.s32.totalorder %s256, 0
      %s259 = sadd.s32 %s258, 1
      %s260 = scalar_select %p257, %s258, %s259
      %p263 = pneg %p257
      %p264 = scmp.eq.s32.totalorder %s28, 1
      %p265 = por %p263, %p264
      %p266 = scmp.ne.s32.totalorder %s258, %s261
      %p267 = scmp.eq.s32.totalorder %s28, 0
      %p268 = por %p266, %p267
      %p269 = scmp.ne.s32.totalorder %s258, %s261
      %p270 = scmp.eq.s32.totalorder %s33, 1
      %p271 = por %p269, %p270
      %p272 = scmp.ne.s32.totalorder %s261, %s262
      %p273 = scmp.eq.s32.totalorder %s33, 0
      %p274 = por %p272, %p273
      %p275 = scmp.ne.s32.totalorder %s261, %s262
      %p276 = scmp.eq.s32.totalorder %s34, 1
      %p277 = por %p275, %p276
      %p279 = scmp.ne.s32.totalorder %s262, %s278
      %p280 = scmp.eq.s32.totalorder %s34, 0
      %p281 = por %p279, %p280
      %p282 = scmp.le.s32.totalorder 1, %s28
      %p283 = scmp.lt.s32.totalorder %s28, 3
      %p284 = pnand %p282, %p283
      %p285 = pneg %p284
      // Predicated region
      $region9: #{tpu_custom_call.1} parent=5 // pred_check
        _
      $region10: #{tpu_custom_call.1} parent=5 // pred_check_branch
        %287 = sbr.rel (%p284) target = $region12
      $region11: #{tpu_custom_call.1} parent=5 // pred_region
        %s288 = ssub.s32 %s28, 1
        // Predicated region
        $region13: #{tpu_custom_call.1} parent=11 // pred_check
          %p289 = pneg %p75
        $region14: #{tpu_custom_call.1} parent=11 // pred_check_branch
          %291 = sbr.rel (%p289) target = $region16
        $region15: #{tpu_custom_call.1} parent=11 // pred_region
          %s293 = ssub.s32 128, 128
          %294 = vsyncadd [#allocation7], %s293
          %s296 = sshll.u32 [#allocation6], 4
          %s297 = int_to_ptr.vmem [resolvable:$true] %s296
          %299 = dma.hbm_to_vmem [thread:$0]  %s1, 128, %s297, [#allocation7]
        $region16: #{tpu_custom_call.1} parent=11 // pred_fallthru
          _
        // Predicated region
        $region17: #{tpu_custom_call.1} parent=11 // pred_check
          %p300 = pneg %p96
        $region18: #{tpu_custom_call.1} parent=11 // pred_check_branch
          %302 = sbr.rel (%p300) target = $region20
        $region19: #{tpu_custom_call.1} parent=11 // pred_region
          %s304 = ssub.s32 128, 128
          %305 = vsyncadd [#allocation7], %s304
          %s307 = sshll.u32 [#allocation8], 4
          %s308 = int_to_ptr.vmem [resolvable:$true] %s307
          %310 = dma.hbm_to_vmem [thread:$0]  %s2, 128, %s308, [#allocation7]
        $region20: #{tpu_custom_call.1} parent=11 // pred_fallthru
          _
        // Predicated region
        $region21: #{tpu_custom_call.1} parent=11 // pred_check
          %p311 = pneg %p117
        $region22: #{tpu_custom_call.1} parent=11 // pred_check_branch
          %313 = sbr.rel (%p311) target = $region24
        $region23: #{tpu_custom_call.1} parent=11 // pred_region
          _
        $region24: #{tpu_custom_call.1} parent=11 // pred_fallthru
          _
        // Predicated region
        $region25: #{tpu_custom_call.1} parent=11 // pred_check
          %p314 = pneg %p138
        $region26: #{tpu_custom_call.1} parent=11 // pred_check_branch
          %316 = sbr.rel (%p314) target = $region28
        $region27: #{tpu_custom_call.1} parent=11 // pred_region
          _
        $region28: #{tpu_custom_call.1} parent=11 // pred_fallthru
          _
        // Predicated region
        $region29: #{tpu_custom_call.1} parent=11 // pred_check
          %p317 = pneg %p159
        $region30: #{tpu_custom_call.1} parent=11 // pred_check_branch
          %319 = sbr.rel (%p317) target = $region32
        $region31: #{tpu_custom_call.1} parent=11 // pred_region
          _
        $region32: #{tpu_custom_call.1} parent=11 // pred_fallthru
          _
        // Predicated region
        $region33: #{tpu_custom_call.1} parent=11 // pred_check
          %p320 = pneg %p180
        $region34: #{tpu_custom_call.1} parent=11 // pred_check_branch
          %322 = sbr.rel (%p320) target = $region36
        $region35: #{tpu_custom_call.1} parent=11 // pred_region
          _
        $region36: #{tpu_custom_call.1} parent=11 // pred_fallthru
          _
        // Predicated region
        $region37: #{tpu_custom_call.1} parent=11 // pred_check
          %p323 = pneg %p201
        $region38: #{tpu_custom_call.1} parent=11 // pred_check_branch
          %325 = sbr.rel (%p323) target = $region40
        $region39: #{tpu_custom_call.1} parent=11 // pred_region
          %s327 = ssub.s32 512, 512
          %328 = vsyncadd [#allocation10], %s327
          %s329 = sshll.u32 [#allocation9], 4
          %s330 = int_to_ptr.vmem [resolvable:$true] %s329
          %335 = dma.hbm_to_vmem [thread:$0]  %s7, 512, %s330, [#allocation10], 128, 128, 8
        $region40: #{tpu_custom_call.1} parent=11 // pred_fallthru
          _
        // Predicated region
        $region41: #{tpu_custom_call.1} parent=11 // pred_check
          %p336 = pneg %p222
        $region42: #{tpu_custom_call.1} parent=11 // pred_check_branch
          %338 = sbr.rel (%p336) target = $region44
        $region43: #{tpu_custom_call.1} parent=11 // pred_region
          _
        $region44: #{tpu_custom_call.1} parent=11 // pred_fallthru
          _
      $region12: #{tpu_custom_call.1} parent=5 // pred_fallthru
        _
      %p339 = scmp.lt.s32.totalorder %s28, 2
      // Predicated region
      $region45: #{tpu_custom_call.1} parent=5 // pred_check
        %p340 = pneg %p339
      $region46: #{tpu_custom_call.1} parent=5 // pred_check_branch
        %342 = sbr.rel (%p340) target = $region48
      $region47: #{tpu_custom_call.1} parent=5 // pred_region
        // Predicated region
        $region49: #{tpu_custom_call.1} parent=47 // pred_check
          %p343 = pneg %p48
        $region50: #{tpu_custom_call.1} parent=47 // pred_check_branch
          %345 = sbr.rel (%p343) target = $region52
        $region51: #{tpu_custom_call.1} parent=47 // pred_region
          %s346 = sand.u32 %s38, 1
          %s347 = scalar_lea.sflag [#allocation4], %s346
          %s348 = sand.u32 %s38, 1
          %s349 = smul.addr %s348, 8
          %s350 = scalar_lea.vmem [#allocation3], %s349
          %s352 = ssub.s32 128, 128
          %353 = vsyncadd %s347, %s352
          %s354 = smul.addr %s28, 128
          %s355 = scalar_lea.hbm %s0, %s354
          %s357 = sshll.u32 %s350, 4
          %s358 = int_to_ptr.vmem [resolvable:$true] %s357
          %360 = dma.hbm_to_vmem [thread:$0]  %s355, 128, %s358, %s347
        $region52: #{tpu_custom_call.1} parent=47 // pred_fallthru
          _
      $region48: #{tpu_custom_call.1} parent=5 // pred_fallthru
        _
      %p361 = scmp.le.s32.totalorder 1, %s28
      %p362 = scmp.lt.s32.totalorder %s28, 3
      %p363 = pnand %p361, %p362
      %p364 = pneg %p363
      // Predicated region
      $region53: #{tpu_custom_call.1} parent=5 // pred_check
        _
      $region54: #{tpu_custom_call.1} parent=5 // pred_check_branch
        %366 = sbr.rel (%p363) target = $region56
      $region55: #{tpu_custom_call.1} parent=5 // pred_region
        %s367 = ssub.s32 %s28, 1
        %s368 = sand.u32 %s41, 1
        %s369 = scalar_lea.sflag [#allocation4], %s368
        %s370 = sand.u32 %s41, 1
        %s371 = smul.addr %s370, 8
        %s372 = scalar_lea.vmem [#allocation3], %s371
        // Predicated region
        $region57: #{tpu_custom_call.1} parent=55 // pred_check
          %p373 = pneg %p54
        $region58: #{tpu_custom_call.1} parent=55 // pred_check_branch
          %375 = sbr.rel (%p373) target = $region60
        $region59: #{tpu_custom_call.1} parent=55 // pred_region
          %376 = dma.done %s369, 128
        $region60: #{tpu_custom_call.1} parent=55 // pred_fallthru
          _
        // Predicated region
        $region61: #{tpu_custom_call.1} parent=55 // pred_check
          %p377 = pneg %p75
        $region62: #{tpu_custom_call.1} parent=55 // pred_check_branch
          %379 = sbr.rel (%p377) target = $region64
        $region63: #{tpu_custom_call.1} parent=55 // pred_region
          %380 = dma.done [#allocation7], 128
        $region64: #{tpu_custom_call.1} parent=55 // pred_fallthru
          _
        // Predicated region
        $region65: #{tpu_custom_call.1} parent=55 // pred_check
          %p381 = pneg %p96
        $region66: #{tpu_custom_call.1} parent=55 // pred_check_branch
          %383 = sbr.rel (%p381) target = $region68
        $region67: #{tpu_custom_call.1} parent=55 // pred_region
          %384 = dma.done [#allocation7], 128
        $region68: #{tpu_custom_call.1} parent=55 // pred_fallthru
          _
        // Predicated region
        $region69: #{tpu_custom_call.1} parent=55 // pred_check
          %p385 = pneg %p201
        $region70: #{tpu_custom_call.1} parent=55 // pred_check_branch
          %387 = sbr.rel (%p385) target = $region72
        $region71: #{tpu_custom_call.1} parent=55 // pred_region
          %388 = dma.done [#allocation10], 512
        $region72: #{tpu_custom_call.1} parent=55 // pred_fallthru
          _
        %s389 = sand.u32 %s41, 1
        %s390 = scalar_lea.sflag [#allocation4], %s389
        %s391 = sand.u32 %s41, 1
        %s392 = smul.addr %s391, 8
        %s393 = scalar_lea.vmem [#allocation3], %s392
        %p394 = pneg %p54
        %p395 = pneg %p51
        %p396 = pneg %p75
        %p397 = pneg %p72
        %p398 = pneg %p96
        %p399 = pneg %p93
        %p400 = pneg %p117
        %p401 = pneg %p114
        %p402 = pneg %p138
        %p403 = pneg %p135
        %p404 = pneg %p159
        %p405 = pneg %p156
        %p406 = pneg %p180
        %p407 = pneg %p177
        %p408 = pneg %p201
        %p409 = pneg %p198
        %p410 = pneg %p222
        %p411 = pneg %p219
        %p412 = pneg %p248
        %p413 = pneg %p245
        %s414 = sand.u32 %s235, 1
        %s415 = scalar_lea.sflag [#allocation5], %s414
        %s416 = sand.u32 %s235, 1
        %s417 = smul.addr %s416, 8
        %s418 = scalar_lea.vmem [#allocation11], %s417
        %p419 = pneg %p274
        %p420 = pneg %p271
        %s421 = sand.u32 %s261, 1
        %s422 = scalar_lea.sflag [#allocation13], %s421
        %s423 = sand.u32 %s261, 1
        %s424 = smul.addr %s423, 32
        %s425 = scalar_lea.vmem [#allocation12], %s424
        %v426 = vld [vmem:[%s372] sm:$0xff]
        %v427 = vld [vmem:[#allocation6] sm:$0xff]
        %v428 = vld [vmem:[#allocation8] sm:$0xff]
        %v429 = vld [vmem:[%s3] sm:$0xff]
        %v430 = vld [vmem:[%s3 + $0x8] sm:$0xff]
        %v431 = vld [vmem:[%s3 + $0x10] sm:$0xff]
        %v432 = vld [vmem:[%s3 + $0x18] sm:$0xff]
        %v433 = vld [vmem:[%s3 + $0x20] sm:$0xff]
        %v434 = vld [vmem:[%s3 + $0x28] sm:$0xff]
        %v435 = vld [vmem:[%s3 + $0x30] sm:$0xff]
        %v436 = vld [vmem:[%s3 + $0x38] sm:$0xff]
        %v437 = vld [vmem:[%s4] sm:$0xff]
        %v438 = vld [vmem:[%s4 + $0x8] sm:$0xff]
        %v439 = vld [vmem:[%s4 + $0x10] sm:$0xff]
        %v440 = vld [vmem:[%s4 + $0x18] sm:$0xff]
        %v441 = vld [vmem:[%s4 + $0x20] sm:$0xff]
        %v442 = vld [vmem:[%s4 + $0x28] sm:$0xff]
        %v443 = vld [vmem:[%s4 + $0x30] sm:$0xff]
        %v444 = vld [vmem:[%s4 + $0x38] sm:$0xff]
        %vm445 = vcmask 523264
        %v447 = vsel %vm445, %v426, 0
        %449 = vmatprep.subr.mxu0 0.0
        %450 = vmatpush1.msra.mxu0 0.0
        %451 = vmatprep.subr.mxu0 0.0
        %452 = vmatpush1.msra.mxu0 0.0
        %453 = vmatprep.subr.mxu0 0.0
        %454 = vmatpush1.msra.mxu0 0.0
        %455 = vmatprep.subr.mxu0 0.0
        %456 = vmatpush1.msra.mxu0 0.0
        %457 = vmatprep.subr.mxu0 0.0
        %458 = vmatpush1.msra.mxu0 0.0
        %459 = vmatprep.subr.mxu0 0.0
        %460 = vmatpush1.msra.mxu0 0.0
        %461 = vmatprep.subr.mxu0 0.0
        %462 = vmatpush1.msra.mxu0 0.0
        %463 = vmatprep.subr.mxu0 0.0
        %464 = vmatpush1.msra.mxu0 0.0
        %465 = vmatprep.subr.mxu0 0.0
        %466 = vmatpush1.msra.mxu0 %v444
        %467 = vmatprep.subr.mxu0 0.0
        %468 = vmatpush1.msra.mxu0 %v443
        %469 = vmatprep.subr.mxu0 0.0
        %470 = vmatpush1.msra.mxu0 %v442
        %471 = vmatprep.subr.mxu0 0.0
        %472 = vmatpush1.msra.mxu0 %v441
        %473 = vmatprep.subr.mxu0 0.0
        %474 = vmatpush1.msra.mxu0 %v440
        %475 = vmatprep.subr.mxu0 0.0
        %476 = vmatpush1.msra.mxu0 %v439
        %477 = vmatprep.subr.mxu0 0.0
        %478 = vmatpush1.msra.mxu0 %v438
        %479 = vmatprep.subr.mxu0 0.0
        %480 = vmatpush1.msra.mxu0 %v437
        %481 = vmatprep.subr.mxu0 0.0
        %482 = vmatpush2.msra.mxu0 0.0
        %483 = vmatprep.subr.mxu0 0.0
        %484 = vmatpush2.msra.mxu0 0.0
        %485 = vmatprep.subr.mxu0 0.0
        %486 = vmatpush2.msra.mxu0 0.0
        %487 = vmatprep.subr.mxu0 0.0
        %488 = vmatpush2.msra.mxu0 0.0
        %489 = vmatprep.subr.mxu0 0.0
        %490 = vmatpush2.msra.mxu0 0.0
        %491 = vmatprep.subr.mxu0 0.0
        %492 = vmatpush2.msra.mxu0 0.0
        %493 = vmatprep.subr.mxu0 0.0
        %494 = vmatpush2.msra.mxu0 0.0
        %495 = vmatprep.subr.mxu0 0.0
        %496 = vmatpush2.msra.mxu0 0.0
        %497 = vmatprep.subr.mxu0 0.0
        %498 = vmatpush2.msra.mxu0 0.0
        %499 = vmatprep.subr.mxu0 0.0
        %500 = vmatpush2.msra.mxu0 0.0
        %501 = vmatprep.subr.mxu0 0.0
        %502 = vmatpush2.msra.mxu0 0.0
        %503 = vmatprep.subr.mxu0 0.0
        %504 = vmatpush2.msra.mxu0 0.0
        %505 = vmatprep.subr.mxu0 0.0
        %506 = vmatpush2.msra.mxu0 0.0
        %507 = vmatprep.subr.mxu0 0.0
        %508 = vmatpush2.msra.mxu0 0.0
        %509 = vmatprep.subr.mxu0 0.0
        %510 = vmatpush2.msra.mxu0 0.0
        %511 = vmatprep.subr.mxu0 0.0
        %512 = vmatpush2.msra.mxu0 0.0
        %513 = vmatprep.mubr.f32.mxu0 0.0
        %514 = vmatmul.mubr.f32.gmra.mxu0 %v447
        %v515 = vpop.f32.mrf.mxu0
        %v516 = vadd.f32 0.0, %v515
        %v517 = vpop.f32.mrf.mxu0
        %518 = vdwg.mxu0
        %v519 = vmul.f32 %v516, %v516
        %vm520 = vcmask 261120
        %v521 = vsel %vm520, %v519, 0.0
        %522 = vadd.xlane.f32.xlu0 %v521
        %v523 = vpop.xlane.xlu0 %522
        %v524 = vrcp.pop 32.0
        %v525 = vmul.f32 %v523, %v524
        %v526 = vadd.f32 %v525, 1e-06
        %v527 = vrsqrt.pop %v526
        %v528 = vmul.f32 %v516, %v527
        %v529 = vld [vmem:[%s5] sm:$0xff]
        %v530 = vld [vmem:[%s5 + $0x8] sm:$0xff]
        %v531 = vld [vmem:[%s5 + $0x10] sm:$0xff]
        %v532 = vld [vmem:[%s5 + $0x18] sm:$0xff]
        %v534 = vsel %vm520, %v528, 0
        %536 = vmatprep.subr.mxu0 0.0
        %537 = vmatpush1.msra.mxu0 0.0
        %538 = vmatprep.subr.mxu0 0.0
        %539 = vmatpush1.msra.mxu0 0.0
        %540 = vmatprep.subr.mxu0 0.0
        %541 = vmatpush1.msra.mxu0 0.0
        %542 = vmatprep.subr.mxu0 0.0
        %543 = vmatpush1.msra.mxu0 0.0
        %544 = vmatprep.subr.mxu0 0.0
        %545 = vmatpush1.msra.mxu0 0.0
        %546 = vmatprep.subr.mxu0 0.0
        %547 = vmatpush1.msra.mxu0 0.0
        %548 = vmatprep.subr.mxu0 0.0
        %549 = vmatpush1.msra.mxu0 0.0
        %550 = vmatprep.subr.mxu0 0.0
        %551 = vmatpush1.msra.mxu0 0.0
        %552 = vmatprep.subr.mxu0 0.0
        %553 = vmatpush1.msra.mxu0 0.0
        %554 = vmatprep.subr.mxu0 0.0
        %555 = vmatpush1.msra.mxu0 0.0
        %556 = vmatprep.subr.mxu0 0.0
        %557 = vmatpush1.msra.mxu0 0.0
        %558 = vmatprep.subr.mxu0 0.0
        %559 = vmatpush1.msra.mxu0 0.0
        %560 = vmatprep.subr.mxu0 0.0
        %561 = vmatpush1.msra.mxu0 %v532
        %562 = vmatprep.subr.mxu0 0.0
        %563 = vmatpush1.msra.mxu0 %v531
        %564 = vmatprep.subr.mxu0 0.0
        %565 = vmatpush1.msra.mxu0 %v530
        %566 = vmatprep.subr.mxu0 0.0
        %567 = vmatpush1.msra.mxu0 %v529
        %568 = vmatprep.subr.mxu0 0.0
        %569 = vmatpush2.msra.mxu0 0.0
        %570 = vmatprep.subr.mxu0 0.0
        %571 = vmatpush2.msra.mxu0 0.0
        %572 = vmatprep.subr.mxu0 0.0
        %573 = vmatpush2.msra.mxu0 0.0
        %574 = vmatprep.subr.mxu0 0.0
        %575 = vmatpush2.msra.mxu0 0.0
        %576 = vmatprep.subr.mxu0 0.0
        %577 = vmatpush2.msra.mxu0 0.0
        %578 = vmatprep.subr.mxu0 0.0
        %579 = vmatpush2.msra.mxu0 0.0
        %580 = vmatprep.subr.mxu0 0.0
        %581 = vmatpush2.msra.mxu0 0.0
        %582 = vmatprep.subr.mxu0 0.0
        %583 = vmatpush2.msra.mxu0 0.0
        %584 = vmatprep.subr.mxu0 0.0
        %585 = vmatpush2.msra.mxu0 0.0
        %586 = vmatprep.subr.mxu0 0.0
        %587 = vmatpush2.msra.mxu0 0.0
        %588 = vmatprep.subr.mxu0 0.0
        %589 = vmatpush2.msra.mxu0 0.0
        %590 = vmatprep.subr.mxu0 0.0
        %591 = vmatpush2.msra.mxu0 0.0
        %592 = vmatprep.subr.mxu0 0.0
        %593 = vmatpush2.msra.mxu0 0.0
        %594 = vmatprep.subr.mxu0 0.0
        %595 = vmatpush2.msra.mxu0 0.0
        %596 = vmatprep.subr.mxu0 0.0
        %597 = vmatpush2.msra.mxu0 0.0
        %598 = vmatprep.subr.mxu0 0.0
        %599 = vmatpush2.msra.mxu0 0.0
        %600 = vmatprep.mubr.f32.mxu0 0.0
        %601 = vmatmul.mubr.f32.gmra.mxu0 %v534
        %v602 = vpop.f32.mrf.mxu0
        %v603 = vadd.f32 0.0, %v602
        %v604 = vpop.f32.mrf.mxu0
        %605 = vdwg.mxu0
        %607 = vrot.lane.b32.xlu0 %v427, 64
        %v608 = vpop.permute.xlu0 %607
        %v610 = vmul.f32 %v603, %v608
        %612 = vrot.lane.b32.xlu0 %v603, 64
        %v613 = vpop.permute.xlu0 %612
        %v614 = vsel %vm445, %v613, 0
        %616 = vmatprep.subr.mxu0 0.0
        %617 = vmatpush1.msra.mxu0 0.0
        %618 = vmatprep.subr.mxu0 0.0
        %619 = vmatpush1.msra.mxu0 0.0
        %620 = vmatprep.subr.mxu0 0.0
        %621 = vmatpush1.msra.mxu0 0.0
        %622 = vmatprep.subr.mxu0 0.0
        %623 = vmatpush1.msra.mxu0 0.0
        %624 = vmatprep.subr.mxu0 0.0
        %625 = vmatpush1.msra.mxu0 0.0
        %626 = vmatprep.subr.mxu0 0.0
        %627 = vmatpush1.msra.mxu0 0.0
        %628 = vmatprep.subr.mxu0 0.0
        %629 = vmatpush1.msra.mxu0 0.0
        %630 = vmatprep.subr.mxu0 0.0
        %631 = vmatpush1.msra.mxu0 0.0
        %632 = vmatprep.subr.mxu0 0.0
        %633 = vmatpush1.msra.mxu0 %v436
        %634 = vmatprep.subr.mxu0 0.0
        %635 = vmatpush1.msra.mxu0 %v435
        %636 = vmatprep.subr.mxu0 0.0
        %637 = vmatpush1.msra.mxu0 %v434
        %638 = vmatprep.subr.mxu0 0.0
        %639 = vmatpush1.msra.mxu0 %v433
        %640 = vmatprep.subr.mxu0 0.0
        %641 = vmatpush1.msra.mxu0 %v432
        %642 = vmatprep.subr.mxu0 0.0
        %643 = vmatpush1.msra.mxu0 %v431
        %644 = vmatprep.subr.mxu0 0.0
        %645 = vmatpush1.msra.mxu0 %v430
        %646 = vmatprep.subr.mxu0 0.0
        %647 = vmatpush1.msra.mxu0 %v429
        %648 = vmatprep.subr.mxu0 0.0
        %649 = vmatpush2.msra.mxu0 0.0
        %650 = vmatprep.subr.mxu0 0.0
        %651 = vmatpush2.msra.mxu0 0.0
        %652 = vmatprep.subr.mxu0 0.0
        %653 = vmatpush2.msra.mxu0 0.0
        %654 = vmatprep.subr.mxu0 0.0
        %655 = vmatpush2.msra.mxu0 0.0
        %656 = vmatprep.subr.mxu0 0.0
        %657 = vmatpush2.msra.mxu0 0.0
        %658 = vmatprep.subr.mxu0 0.0
        %659 = vmatpush2.msra.mxu0 0.0
        %660 = vmatprep.subr.mxu0 0.0
        %661 = vmatpush2.msra.mxu0 0.0
        %662 = vmatprep.subr.mxu0 0.0
        %663 = vmatpush2.msra.mxu0 0.0
        %664 = vmatprep.subr.mxu0 0.0
        %665 = vmatpush2.msra.mxu0 0.0
        %666 = vmatprep.subr.mxu0 0.0
        %667 = vmatpush2.msra.mxu0 0.0
        %668 = vmatprep.subr.mxu0 0.0
        %669 = vmatpush2.msra.mxu0 0.0
        %670 = vmatprep.subr.mxu0 0.0
        %671 = vmatpush2.msra.mxu0 0.0
        %672 = vmatprep.subr.mxu0 0.0
        %673 = vmatpush2.msra.mxu0 0.0
        %674 = vmatprep.subr.mxu0 0.0
        %675 = vmatpush2.msra.mxu0 0.0
        %676 = vmatprep.subr.mxu0 0.0
        %677 = vmatpush2.msra.mxu0 0.0
        %678 = vmatprep.subr.mxu0 0.0
        %679 = vmatpush2.msra.mxu0 0.0
        %680 = vmatprep.mubr.f32.mxu0 0.0
        %681 = vmatmul.mubr.f32.gmra.mxu0 %v614
        %v682 = vpop.f32.mrf.mxu0
        %v683 = vadd.f32 0.0, %v682
        %v684 = vpop.f32.mrf.mxu0
        %685 = vdwg.mxu0
        %v686 = vmul.f32 %v683, %v428
        %688 = vrot.lane.b32.xlu0 %v686, 64
        %v689 = vpop.permute.xlu0 %688
        %v691 = vadd.f32 %v610, %v689
        %v692 = vld [vmem:[%s6] sm:$0xff]
        %v693 = vld [vmem:[%s6 + $0x8] sm:$0xff]
        %v694 = vld [vmem:[%s6 + $0x10] sm:$0xff]
        %v695 = vld [vmem:[%s6 + $0x18] sm:$0xff]
        %v696 = vld [vmem:[%s6 + $0x20] sm:$0xff]
        %v697 = vld [vmem:[%s6 + $0x28] sm:$0xff]
        %v698 = vld [vmem:[%s6 + $0x30] sm:$0xff]
        %v699 = vld [vmem:[%s6 + $0x38] sm:$0xff]
        %700 = vmatprep.subr.mxu0 0.0
        %701 = vmatpush1.msra.mxu0 0.0
        %702 = vmatprep.subr.mxu0 0.0
        %703 = vmatpush1.msra.mxu0 0.0
        %704 = vmatprep.subr.mxu0 0.0
        %705 = vmatpush1.msra.mxu0 0.0
        %706 = vmatprep.subr.mxu0 0.0
        %707 = vmatpush1.msra.mxu0 0.0
        %708 = vmatprep.subr.mxu0 0.0
        %709 = vmatpush1.msra.mxu0 0.0
        %710 = vmatprep.subr.mxu0 0.0
        %711 = vmatpush1.msra.mxu0 0.0
        %712 = vmatprep.subr.mxu0 0.0
        %713 = vmatpush1.msra.mxu0 0.0
        %714 = vmatprep.subr.mxu0 0.0
        %715 = vmatpush1.msra.mxu0 0.0
        %716 = vmatprep.subr.mxu0 0.0
        %717 = vmatpush1.msra.mxu0 %v699
        %718 = vmatprep.subr.mxu0 0.0
        %719 = vmatpush1.msra.mxu0 %v698
        %720 = vmatprep.subr.mxu0 0.0
        %721 = vmatpush1.msra.mxu0 %v697
        %722 = vmatprep.subr.mxu0 0.0
        %723 = vmatpush1.msra.mxu0 %v696
        %724 = vmatprep.subr.mxu0 0.0
        %725 = vmatpush1.msra.mxu0 %v695
        %726 = vmatprep.subr.mxu0 0.0
        %727 = vmatpush1.msra.mxu0 %v694
        %728 = vmatprep.subr.mxu0 0.0
        %729 = vmatpush1.msra.mxu0 %v693
        %730 = vmatprep.subr.mxu0 0.0
        %731 = vmatpush1.msra.mxu0 %v692
        %732 = vmatprep.subr.mxu0 0.0
        %733 = vmatpush2.msra.mxu0 0.0
        %734 = vmatprep.subr.mxu0 0.0
        %735 = vmatpush2.msra.mxu0 0.0
        %736 = vmatprep.subr.mxu0 0.0
        %737 = vmatpush2.msra.mxu0 0.0
        %738 = vmatprep.subr.mxu0 0.0
        %739 = vmatpush2.msra.mxu0 0.0
        %740 = vmatprep.subr.mxu0 0.0
        %741 = vmatpush2.msra.mxu0 0.0
        %742 = vmatprep.subr.mxu0 0.0
        %743 = vmatpush2.msra.mxu0 0.0
        %744 = vmatprep.subr.mxu0 0.0
        %745 = vmatpush2.msra.mxu0 0.0
        %746 = vmatprep.subr.mxu0 0.0
        %747 = vmatpush2.msra.mxu0 0.0
        %748 = vmatprep.subr.mxu0 0.0
        %749 = vmatpush2.msra.mxu0 0.0
        %750 = vmatprep.subr.mxu0 0.0
        %751 = vmatpush2.msra.mxu0 0.0
        %752 = vmatprep.subr.mxu0 0.0
        %753 = vmatpush2.msra.mxu0 0.0
        %754 = vmatprep.subr.mxu0 0.0
        %755 = vmatpush2.msra.mxu0 0.0
        %756 = vmatprep.subr.mxu0 0.0
        %757 = vmatpush2.msra.mxu0 0.0
        %758 = vmatprep.subr.mxu0 0.0
        %759 = vmatpush2.msra.mxu0 0.0
        %760 = vmatprep.subr.mxu0 0.0
        %761 = vmatpush2.msra.mxu0 0.0
        %762 = vmatprep.subr.mxu0 0.0
        %763 = vmatpush2.msra.mxu0 0.0
        %764 = vmatprep.mubr.f32.mxu0 0.0
        %765 = vmatmul.mubr.f32.gmra.mxu0 %v447
        %v766 = vpop.f32.mrf.mxu0
        %v767 = vadd.f32 0.0, %v766
        %v768 = vpop.f32.mrf.mxu0
        %769 = vdwg.mxu0
        %v770 = vmul.f32 %v767, %v767
        %v771 = vsel %vm520, %v770, 0.0
        %772 = vadd.xlane.f32.xlu0 %v771
        %v773 = vpop.xlane.xlu0 %772
        %v774 = vmul.f32 %v773, %v524
        %v775 = vadd.f32 %v774, 1e-06
        %v776 = vrsqrt.pop %v775
        %v777 = vmul.f32 %v767, %v776
        %v778 = vld [vmem:[#allocation9] sm:$0xff]
        %v779 = vld [vmem:[#allocation9 + $0x8] sm:$0xff]
        %v780 = vld [vmem:[#allocation9 + $0x10] sm:$0xff]
        %v781 = vld [vmem:[#allocation9 + $0x18] sm:$0xff]
        %v783 = vsel %vm520, %v777, 0
        %785 = vmatprep.subr.mxu0 0.0
        %786 = vmatpush1.msra.mxu0 0.0
        %787 = vmatprep.subr.mxu0 0.0
        %788 = vmatpush1.msra.mxu0 0.0
        %789 = vmatprep.subr.mxu0 0.0
        %790 = vmatpush1.msra.mxu0 0.0
        %791 = vmatprep.subr.mxu0 0.0
        %792 = vmatpush1.msra.mxu0 0.0
        %793 = vmatprep.subr.mxu0 0.0
        %794 = vmatpush1.msra.mxu0 0.0
        %795 = vmatprep.subr.mxu0 0.0
        %796 = vmatpush1.msra.mxu0 0.0
        %797 = vmatprep.subr.mxu0 0.0
        %798 = vmatpush1.msra.mxu0 0.0
        %799 = vmatprep.subr.mxu0 0.0
        %800 = vmatpush1.msra.mxu0 0.0
        %801 = vmatprep.subr.mxu0 0.0
        %802 = vmatpush1.msra.mxu0 0.0
        %803 = vmatprep.subr.mxu0 0.0
        %804 = vmatpush1.msra.mxu0 0.0
        %805 = vmatprep.subr.mxu0 0.0
        %806 = vmatpush1.msra.mxu0 0.0
        %807 = vmatprep.subr.mxu0 0.0
        %808 = vmatpush1.msra.mxu0 0.0
        %809 = vmatprep.subr.mxu0 0.0
        %810 = vmatpush1.msra.mxu0 %v781
        %811 = vmatprep.subr.mxu0 0.0
        %812 = vmatpush1.msra.mxu0 %v780
        %813 = vmatprep.subr.mxu0 0.0
        %814 = vmatpush1.msra.mxu0 %v779
        %815 = vmatprep.subr.mxu0 0.0
        %816 = vmatpush1.msra.mxu0 %v778
        %817 = vmatprep.subr.mxu0 0.0
        %818 = vmatpush2.msra.mxu0 0.0
        %819 = vmatprep.subr.mxu0 0.0
        %820 = vmatpush2.msra.mxu0 0.0
        %821 = vmatprep.subr.mxu0 0.0
        %822 = vmatpush2.msra.mxu0 0.0
        %823 = vmatprep.subr.mxu0 0.0
        %824 = vmatpush2.msra.mxu0 0.0
        %825 = vmatprep.subr.mxu0 0.0
        %826 = vmatpush2.msra.mxu0 0.0
        %827 = vmatprep.subr.mxu0 0.0
        %828 = vmatpush2.msra.mxu0 0.0
        %829 = vmatprep.subr.mxu0 0.0
        %830 = vmatpush2.msra.mxu0 0.0
        %831 = vmatprep.subr.mxu0 0.0
        %832 = vmatpush2.msra.mxu0 0.0
        %833 = vmatprep.subr.mxu0 0.0
        %834 = vmatpush2.msra.mxu0 0.0
        %835 = vmatprep.subr.mxu0 0.0
        %836 = vmatpush2.msra.mxu0 0.0
        %837 = vmatprep.subr.mxu0 0.0
        %838 = vmatpush2.msra.mxu0 0.0
        %839 = vmatprep.subr.mxu0 0.0
        %840 = vmatpush2.msra.mxu0 0.0
        %841 = vmatprep.subr.mxu0 0.0
        %842 = vmatpush2.msra.mxu0 0.0
        %843 = vmatprep.subr.mxu0 0.0
        %844 = vmatpush2.msra.mxu0 0.0
        %845 = vmatprep.subr.mxu0 0.0
        %846 = vmatpush2.msra.mxu0 0.0
        %847 = vmatprep.subr.mxu0 0.0
        %848 = vmatpush2.msra.mxu0 0.0
        %849 = vmatprep.mubr.f32.mxu0 0.0
        %850 = vmatmul.mubr.f32.gmra.mxu0 %v783
        %v851 = vpop.f32.mrf.mxu0
        %v852 = vadd.f32 0.0, %v851
        %v853 = vpop.f32.mrf.mxu0
        %854 = vdwg.mxu0
        %855 = vrot.lane.b32.xlu0 %v427, 32
        %v856 = vpop.permute.xlu0 %855
        %v858 = vmul.f32 %v767, %v856
        %860 = vrot.lane.b32.xlu0 %v767, 96
        %v861 = vpop.permute.xlu0 %860
        %vm862 = vcmask 130048
        %v863 = vsel %vm862, %v861, 0
        %865 = vmatprep.subr.mxu0 0.0
        %866 = vmatpush1.msra.mxu0 0.0
        %867 = vmatprep.subr.mxu0 0.0
        %868 = vmatpush1.msra.mxu0 0.0
        %869 = vmatprep.subr.mxu0 0.0
        %870 = vmatpush1.msra.mxu0 0.0
        %871 = vmatprep.subr.mxu0 0.0
        %872 = vmatpush1.msra.mxu0 0.0
        %873 = vmatprep.subr.mxu0 0.0
        %874 = vmatpush1.msra.mxu0 0.0
        %875 = vmatprep.subr.mxu0 0.0
        %876 = vmatpush1.msra.mxu0 0.0
        %877 = vmatprep.subr.mxu0 0.0
        %878 = vmatpush1.msra.mxu0 0.0
        %879 = vmatprep.subr.mxu0 0.0
        %880 = vmatpush1.msra.mxu0 0.0
        %881 = vmatprep.subr.mxu0 0.0
        %882 = vmatpush1.msra.mxu0 0.0
        %883 = vmatprep.subr.mxu0 0.0
        %884 = vmatpush1.msra.mxu0 0.0
        %885 = vmatprep.subr.mxu0 0.0
        %886 = vmatpush1.msra.mxu0 0.0
        %887 = vmatprep.subr.mxu0 0.0
        %888 = vmatpush1.msra.mxu0 0.0
        %889 = vmatprep.subr.mxu0 0.0
        %890 = vmatpush1.msra.mxu0 0.0
        %891 = vmatprep.subr.mxu0 0.0
        %892 = vmatpush1.msra.mxu0 0.0
        %893 = vmatprep.subr.mxu0 0.0
        %894 = vmatpush1.msra.mxu0 %v430
        %895 = vmatprep.subr.mxu0 0.0
        %896 = vmatpush1.msra.mxu0 %v429
        %897 = vmatprep.subr.mxu0 0.0
        %898 = vmatpush2.msra.mxu0 0.0
        %899 = vmatprep.subr.mxu0 0.0
        %900 = vmatpush2.msra.mxu0 0.0
        %901 = vmatprep.subr.mxu0 0.0
        %902 = vmatpush2.msra.mxu0 0.0
        %903 = vmatprep.subr.mxu0 0.0
        %904 = vmatpush2.msra.mxu0 0.0
        %905 = vmatprep.subr.mxu0 0.0
        %906 = vmatpush2.msra.mxu0 0.0
        %907 = vmatprep.subr.mxu0 0.0
        %908 = vmatpush2.msra.mxu0 0.0
        %909 = vmatprep.subr.mxu0 0.0
        %910 = vmatpush2.msra.mxu0 0.0
        %911 = vmatprep.subr.mxu0 0.0
        %912 = vmatpush2.msra.mxu0 0.0
        %913 = vmatprep.subr.mxu0 0.0
        %914 = vmatpush2.msra.mxu0 0.0
        %915 = vmatprep.subr.mxu0 0.0
        %916 = vmatpush2.msra.mxu0 0.0
        %917 = vmatprep.subr.mxu0 0.0
        %918 = vmatpush2.msra.mxu0 0.0
        %919 = vmatprep.subr.mxu0 0.0
        %920 = vmatpush2.msra.mxu0 0.0
        %921 = vmatprep.subr.mxu0 0.0
        %922 = vmatpush2.msra.mxu0 0.0
        %923 = vmatprep.subr.mxu0 0.0
        %924 = vmatpush2.msra.mxu0 0.0
        %925 = vmatprep.subr.mxu0 0.0
        %926 = vmatpush2.msra.mxu0 0.0
        %927 = vmatprep.subr.mxu0 0.0
        %928 = vmatpush2.msra.mxu0 0.0
        %929 = vmatprep.mubr.f32.mxu0 0.0
        %930 = vmatmul.mubr.f32.gmra.mxu0 %v863
        %v931 = vpop.f32.mrf.mxu0
        %v932 = vadd.f32 0.0, %v931
        %v933 = vpop.f32.mrf.mxu0
        %934 = vdwg.mxu0
        %v935 = vmul.f32 %v932, %v428
        %937 = vrot.lane.b32.xlu0 %v935, 32
        %v938 = vpop.permute.xlu0 %937
        %v940 = vadd.f32 %v858, %v938
        %v941 = vlaneseq
        %v942 = vshrl.u32 %v941, 7
        %v943 = vlaneseq
        %v944 = vand.u32 %v943, 127
        %vm945 = vcmp.le.s32.totalorder %v944, %v942
        %v946 = vsel %vm945, 0.0, -3.4028235e+38
        %948 = vrot.lane.b32.xlu0 %v691, 64
        %v949 = vpop.permute.xlu0 %948
        %951 = vrot.lane.b32.xlu0 %v940, 96
        %v952 = vpop.permute.xlu0 %951
        %v953 = vsel %vm862, %v949, 0
        %v955 = vsel %vm862, %v952, 0
        %957 = vmatprep.subr.mxu0 0.0
        %958 = vmatpush1.xpose.msra.mxu0 0.0
        %959 = vmatprep.subr.mxu0 0.0
        %960 = vmatpush1.xpose.msra.mxu0 0.0
        %961 = vmatprep.subr.mxu0 0.0
        %962 = vmatpush1.xpose.msra.mxu0 0.0
        %963 = vmatprep.subr.mxu0 0.0
        %964 = vmatpush1.xpose.msra.mxu0 0.0
        %965 = vmatprep.subr.mxu0 0.0
        %966 = vmatpush1.xpose.msra.mxu0 0.0
        %967 = vmatprep.subr.mxu0 0.0
        %968 = vmatpush1.xpose.msra.mxu0 0.0
        %969 = vmatprep.subr.mxu0 0.0
        %970 = vmatpush1.xpose.msra.mxu0 0.0
        %971 = vmatprep.subr.mxu0 0.0
        %972 = vmatpush1.xpose.msra.mxu0 0.0
        %973 = vmatprep.subr.mxu0 0.0
        %974 = vmatpush1.xpose.msra.mxu0 0.0
        %975 = vmatprep.subr.mxu0 0.0
        %976 = vmatpush1.xpose.msra.mxu0 0.0
        %977 = vmatprep.subr.mxu0 0.0
        %978 = vmatpush1.xpose.msra.mxu0 0.0
        %979 = vmatprep.subr.mxu0 0.0
        %980 = vmatpush1.xpose.msra.mxu0 0.0
        %981 = vmatprep.subr.mxu0 0.0
        %982 = vmatpush1.xpose.msra.mxu0 0.0
        %983 = vmatprep.subr.mxu0 0.0
        %984 = vmatpush1.xpose.msra.mxu0 0.0
        %985 = vmatprep.subr.mxu0 0.0
        %986 = vmatpush1.xpose.msra.mxu0 0.0
        %987 = vmatprep.subr.mxu0 0.0
        %988 = vmatpush1.xpose.msra.mxu0 %v955
        %989 = vmatprep.subr.mxu0 0.0
        %990 = vmatpush2.xpose.msra.mxu0 0.0
        %991 = vmatprep.subr.mxu0 0.0
        %992 = vmatpush2.xpose.msra.mxu0 0.0
        %993 = vmatprep.subr.mxu0 0.0
        %994 = vmatpush2.xpose.msra.mxu0 0.0
        %995 = vmatprep.subr.mxu0 0.0
        %996 = vmatpush2.xpose.msra.mxu0 0.0
        %997 = vmatprep.subr.mxu0 0.0
        %998 = vmatpush2.xpose.msra.mxu0 0.0
        %999 = vmatprep.subr.mxu0 0.0
        %1000 = vmatpush2.xpose.msra.mxu0 0.0
        %1001 = vmatprep.subr.mxu0 0.0
        %1002 = vmatpush2.xpose.msra.mxu0 0.0
        %1003 = vmatprep.subr.mxu0 0.0
        %1004 = vmatpush2.xpose.msra.mxu0 0.0
        %1005 = vmatprep.subr.mxu0 0.0
        %1006 = vmatpush2.xpose.msra.mxu0 0.0
        %1007 = vmatprep.subr.mxu0 0.0
        %1008 = vmatpush2.xpose.msra.mxu0 0.0
        %1009 = vmatprep.subr.mxu0 0.0
        %1010 = vmatpush2.xpose.msra.mxu0 0.0
        %1011 = vmatprep.subr.mxu0 0.0
        %1012 = vmatpush2.xpose.msra.mxu0 0.0
        %1013 = vmatprep.subr.mxu0 0.0
        %1014 = vmatpush2.xpose.msra.mxu0 0.0
        %1015 = vmatprep.subr.mxu0 0.0
        %1016 = vmatpush2.xpose.msra.mxu0 0.0
        %1017 = vmatprep.subr.mxu0 0.0
        %1018 = vmatpush2.xpose.msra.mxu0 0.0
        %1019 = vmatprep.subr.mxu0 0.0
        %1020 = vmatpush2.xpose.msra.mxu0 0.0
        %1021 = vmatprep.mubr.f32.mxu0 0.0
        %1022 = vmatmul.mubr.f32.gmra.mxu0 %v953
        %v1023 = vpop.f32.mrf.mxu0
        %v1024 = vadd.f32 0.0, %v1023
        %v1025 = vpop.f32.mrf.mxu0
        %1026 = vdwg.mxu0
        %v1027 = vsel %vm862, %v603, 0
        %v1030 = vsel %vm862, %v852, 0
        %1032 = vmatprep.subr.mxu0 0.0
        %1033 = vmatpush1.xpose.msra.mxu0 0.0
        %1034 = vmatprep.subr.mxu0 0.0
        %1035 = vmatpush1.xpose.msra.mxu0 0.0
        %1036 = vmatprep.subr.mxu0 0.0
        %1037 = vmatpush1.xpose.msra.mxu0 0.0
        %1038 = vmatprep.subr.mxu0 0.0
        %1039 = vmatpush1.xpose.msra.mxu0 0.0
        %1040 = vmatprep.subr.mxu0 0.0
        %1041 = vmatpush1.xpose.msra.mxu0 0.0
        %1042 = vmatprep.subr.mxu0 0.0
        %1043 = vmatpush1.xpose.msra.mxu0 0.0
        %1044 = vmatprep.subr.mxu0 0.0
        %1045 = vmatpush1.xpose.msra.mxu0 0.0
        %1046 = vmatprep.subr.mxu0 0.0
        %1047 = vmatpush1.xpose.msra.mxu0 0.0
        %1048 = vmatprep.subr.mxu0 0.0
        %1049 = vmatpush1.xpose.msra.mxu0 0.0
        %1050 = vmatprep.subr.mxu0 0.0
        %1051 = vmatpush1.xpose.msra.mxu0 0.0
        %1052 = vmatprep.subr.mxu0 0.0
        %1053 = vmatpush1.xpose.msra.mxu0 0.0
        %1054 = vmatprep.subr.mxu0 0.0
        %1055 = vmatpush1.xpose.msra.mxu0 0.0
        %1056 = vmatprep.subr.mxu0 0.0
        %1057 = vmatpush1.xpose.msra.mxu0 0.0
        %1058 = vmatprep.subr.mxu0 0.0
        %1059 = vmatpush1.xpose.msra.mxu0 0.0
        %1060 = vmatprep.subr.mxu0 0.0
        %1061 = vmatpush1.xpose.msra.mxu0 0.0
        %1062 = vmatprep.subr.mxu0 0.0
        %1063 = vmatpush1.xpose.msra.mxu0 %v1030
        %1064 = vmatprep.subr.mxu0 0.0
        %1065 = vmatpush2.xpose.msra.mxu0 0.0
        %1066 = vmatprep.subr.mxu0 0.0
        %1067 = vmatpush2.xpose.msra.mxu0 0.0
        %1068 = vmatprep.subr.mxu0 0.0
        %1069 = vmatpush2.xpose.msra.mxu0 0.0
        %1070 = vmatprep.subr.mxu0 0.0
        %1071 = vmatpush2.xpose.msra.mxu0 0.0
        %1072 = vmatprep.subr.mxu0 0.0
        %1073 = vmatpush2.xpose.msra.mxu0 0.0
        %1074 = vmatprep.subr.mxu0 0.0
        %1075 = vmatpush2.xpose.msra.mxu0 0.0
        %1076 = vmatprep.subr.mxu0 0.0
        %1077 = vmatpush2.xpose.msra.mxu0 0.0
        %1078 = vmatprep.subr.mxu0 0.0
        %1079 = vmatpush2.xpose.msra.mxu0 0.0
        %1080 = vmatprep.subr.mxu0 0.0
        %1081 = vmatpush2.xpose.msra.mxu0 0.0
        %1082 = vmatprep.subr.mxu0 0.0
        %1083 = vmatpush2.xpose.msra.mxu0 0.0
        %1084 = vmatprep.subr.mxu0 0.0
        %1085 = vmatpush2.xpose.msra.mxu0 0.0
        %1086 = vmatprep.subr.mxu0 0.0
        %1087 = vmatpush2.xpose.msra.mxu0 0.0
        %1088 = vmatprep.subr.mxu0 0.0
        %1089 = vmatpush2.xpose.msra.mxu0 0.0
        %1090 = vmatprep.subr.mxu0 0.0
        %1091 = vmatpush2.xpose.msra.mxu0 0.0
        %1092 = vmatprep.subr.mxu0 0.0
        %1093 = vmatpush2.xpose.msra.mxu0 0.0
        %1094 = vmatprep.subr.mxu0 0.0
        %1095 = vmatpush2.xpose.msra.mxu0 0.0
        %1096 = vmatprep.mubr.f32.mxu0 0.0
        %1097 = vmatmul.mubr.f32.gmra.mxu0 %v1027
        %v1098 = vpop.f32.mrf.mxu0
        %v1099 = vadd.f32 %v1024, %v1098
        %v1100 = vpop.f32.mrf.mxu0
        %1101 = vdwg.mxu0
        %v1102 = vmul.f32 %v1099, 0.17677669
        %v1103 = vadd.f32 %v1102, %v946
        %vm1104 = vcmask 64512
        %v1105 = vsel %vm1104, %v1103, -inf
        %1106 = vmax.xlane.f32.xlu0 %v1105
        %v1107 = vpop.xlane.xlu0 %1106
        %v1108 = vsub.f32 %v1103, %v1107
        %v1109 = vmul.f32 %v1108, 1.442695
        %v1110 = vpow.pop %v1109
        %v1111 = vsel %vm1104, %v1110, 0.0
        %1112 = vadd.xlane.f32.xlu0 %v1111
        %v1113 = vpop.xlane.xlu0 %1112
        %v1114 = vrcp.pop %v1113
        %v1115 = vmul.f32 %v1110, %v1114
        %1116 = vrot.lane.b32.xlu0 %v852, 64
        %v1117 = vpop.permute.xlu0 %1116
        %v1120 = vsel %vm1104, %v1115, 0
        %1122 = vmatprep.subr.mxu0 0.0
        %1123 = vmatpush1.msra.mxu0 0.0
        %1124 = vmatprep.subr.mxu0 0.0
        %1125 = vmatpush1.msra.mxu0 0.0
        %1126 = vmatprep.subr.mxu0 0.0
        %1127 = vmatpush1.msra.mxu0 0.0
        %1128 = vmatprep.subr.mxu0 0.0
        %1129 = vmatpush1.msra.mxu0 0.0
        %1130 = vmatprep.subr.mxu0 0.0
        %1131 = vmatpush1.msra.mxu0 0.0
        %1132 = vmatprep.subr.mxu0 0.0
        %1133 = vmatpush1.msra.mxu0 0.0
        %1134 = vmatprep.subr.mxu0 0.0
        %1135 = vmatpush1.msra.mxu0 0.0
        %1136 = vmatprep.subr.mxu0 0.0
        %1137 = vmatpush1.msra.mxu0 0.0
        %1138 = vmatprep.subr.mxu0 0.0
        %1139 = vmatpush1.msra.mxu0 0.0
        %1140 = vmatprep.subr.mxu0 0.0
        %1141 = vmatpush1.msra.mxu0 0.0
        %1142 = vmatprep.subr.mxu0 0.0
        %1143 = vmatpush1.msra.mxu0 0.0
        %1144 = vmatprep.subr.mxu0 0.0
        %1145 = vmatpush1.msra.mxu0 0.0
        %1146 = vmatprep.subr.mxu0 0.0
        %1147 = vmatpush1.msra.mxu0 0.0
        %1148 = vmatprep.subr.mxu0 0.0
        %1149 = vmatpush1.msra.mxu0 0.0
        %1150 = vmatprep.subr.mxu0 0.0
        %1151 = vmatpush1.msra.mxu0 0.0
        %1152 = vmatprep.subr.mxu0 0.0
        %1153 = vmatpush1.msra.mxu0 %v1117
        %1154 = vmatprep.subr.mxu0 0.0
        %1155 = vmatpush2.msra.mxu0 0.0
        %1156 = vmatprep.subr.mxu0 0.0
        %1157 = vmatpush2.msra.mxu0 0.0
        %1158 = vmatprep.subr.mxu0 0.0
        %1159 = vmatpush2.msra.mxu0 0.0
        %1160 = vmatprep.subr.mxu0 0.0
        %1161 = vmatpush2.msra.mxu0 0.0
        %1162 = vmatprep.subr.mxu0 0.0
        %1163 = vmatpush2.msra.mxu0 0.0
        %1164 = vmatprep.subr.mxu0 0.0
        %1165 = vmatpush2.msra.mxu0 0.0
        %1166 = vmatprep.subr.mxu0 0.0
        %1167 = vmatpush2.msra.mxu0 0.0
        %1168 = vmatprep.subr.mxu0 0.0
        %1169 = vmatpush2.msra.mxu0 0.0
        %1170 = vmatprep.subr.mxu0 0.0
        %1171 = vmatpush2.msra.mxu0 0.0
        %1172 = vmatprep.subr.mxu0 0.0
        %1173 = vmatpush2.msra.mxu0 0.0
        %1174 = vmatprep.subr.mxu0 0.0
        %1175 = vmatpush2.msra.mxu0 0.0
        %1176 = vmatprep.subr.mxu0 0.0
        %1177 = vmatpush2.msra.mxu0 0.0
        %1178 = vmatprep.subr.mxu0 0.0
        %1179 = vmatpush2.msra.mxu0 0.0
        %1180 = vmatprep.subr.mxu0 0.0
        %1181 = vmatpush2.msra.mxu0 0.0
        %1182 = vmatprep.subr.mxu0 0.0
        %1183 = vmatpush2.msra.mxu0 0.0
        %1184 = vmatprep.subr.mxu0 0.0
        %1185 = vmatpush2.msra.mxu0 0.0
        %1186 = vmatprep.mubr.f32.mxu0 0.0
        %1187 = vmatmul.mubr.f32.gmra.mxu0 %v1120
        %v1188 = vpop.f32.mrf.mxu0
        %v1189 = vadd.f32 0.0, %v1188
        %v1190 = vpop.f32.mrf.mxu0
        %1191 = vdwg.mxu0
        %1192 = vst.msk [vmem:[#allocation2] sm:$0xff] %vm862, %v1189
        %1193 = vst.msk [vmem:[%s425] sm:$0xff] %vm1104, %v1115
        %1194 = vrot.lane.b32.xlu0 %v691, 48
        %v1195 = vpop.permute.xlu0 %1194
        %v1196 = vsel %vm862, %v1195, 0
        %1198 = vmatprep.subr.mxu0 0.0
        %1199 = vmatpush1.xpose.msra.mxu0 0.0
        %1200 = vmatprep.subr.mxu0 0.0
        %1201 = vmatpush1.xpose.msra.mxu0 0.0
        %1202 = vmatprep.subr.mxu0 0.0
        %1203 = vmatpush1.xpose.msra.mxu0 0.0
        %1204 = vmatprep.subr.mxu0 0.0
        %1205 = vmatpush1.xpose.msra.mxu0 0.0
        %1206 = vmatprep.subr.mxu0 0.0
        %1207 = vmatpush1.xpose.msra.mxu0 0.0
        %1208 = vmatprep.subr.mxu0 0.0
        %1209 = vmatpush1.xpose.msra.mxu0 0.0
        %1210 = vmatprep.subr.mxu0 0.0
        %1211 = vmatpush1.xpose.msra.mxu0 0.0
        %1212 = vmatprep.subr.mxu0 0.0
        %1213 = vmatpush1.xpose.msra.mxu0 0.0
        %1214 = vmatprep.subr.mxu0 0.0
        %1215 = vmatpush1.xpose.msra.mxu0 0.0
        %1216 = vmatprep.subr.mxu0 0.0
        %1217 = vmatpush1.xpose.msra.mxu0 0.0
        %1218 = vmatprep.subr.mxu0 0.0
        %1219 = vmatpush1.xpose.msra.mxu0 0.0
        %1220 = vmatprep.subr.mxu0 0.0
        %1221 = vmatpush1.xpose.msra.mxu0 0.0
        %1222 = vmatprep.subr.mxu0 0.0
        %1223 = vmatpush1.xpose.msra.mxu0 0.0
        %1224 = vmatprep.subr.mxu0 0.0
        %1225 = vmatpush1.xpose.msra.mxu0 0.0
        %1226 = vmatprep.subr.mxu0 0.0
        %1227 = vmatpush1.xpose.msra.mxu0 0.0
        %1228 = vmatprep.subr.mxu0 0.0
        %1229 = vmatpush1.xpose.msra.mxu0 %v955
        %1230 = vmatprep.subr.mxu0 0.0
        %1231 = vmatpush2.xpose.msra.mxu0 0.0
        %1232 = vmatprep.subr.mxu0 0.0
        %1233 = vmatpush2.xpose.msra.mxu0 0.0
        %1234 = vmatprep.subr.mxu0 0.0
        %1235 = vmatpush2.xpose.msra.mxu0 0.0
        %1236 = vmatprep.subr.mxu0 0.0
        %1237 = vmatpush2.xpose.msra.mxu0 0.0
        %1238 = vmatprep.subr.mxu0 0.0
        %1239 = vmatpush2.xpose.msra.mxu0 0.0
        %1240 = vmatprep.subr.mxu0 0.0
        %1241 = vmatpush2.xpose.msra.mxu0 0.0
        %1242 = vmatprep.subr.mxu0 0.0
        %1243 = vmatpush2.xpose.msra.mxu0 0.0
        %1244 = vmatprep.subr.mxu0 0.0
        %1245 = vmatpush2.xpose.msra.mxu0 0.0
        %1246 = vmatprep.subr.mxu0 0.0
        %1247 = vmatpush2.xpose.msra.mxu0 0.0
        %1248 = vmatprep.subr.mxu0 0.0
        %1249 = vmatpush2.xpose.msra.mxu0 0.0
        %1250 = vmatprep.subr.mxu0 0.0
        %1251 = vmatpush2.xpose.msra.mxu0 0.0
        %1252 = vmatprep.subr.mxu0 0.0
        %1253 = vmatpush2.xpose.msra.mxu0 0.0
        %1254 = vmatprep.subr.mxu0 0.0
        %1255 = vmatpush2.xpose.msra.mxu0 0.0
        %1256 = vmatprep.subr.mxu0 0.0
        %1257 = vmatpush2.xpose.msra.mxu0 0.0
        %1258 = vmatprep.subr.mxu0 0.0
        %1259 = vmatpush2.xpose.msra.mxu0 0.0
        %1260 = vmatprep.subr.mxu0 0.0
        %1261 = vmatpush2.xpose.msra.mxu0 0.0
        %1262 = vmatprep.mubr.f32.mxu0 0.0
        %1263 = vmatmul.mubr.f32.gmra.mxu0 %v1196
        %v1264 = vpop.f32.mrf.mxu0
        %v1265 = vadd.f32 0.0, %v1264
        %v1266 = vpop.f32.mrf.mxu0
        %1267 = vdwg.mxu0
        %1268 = vrot.lane.b32.xlu0 %v603, 112
        %v1269 = vpop.permute.xlu0 %1268
        %1270 = vrot.lane.b32.xlu0 %v852, 112
        %v1271 = vpop.permute.xlu0 %1270
        %v1272 = vsel %vm862, %v1269, 0
        %v1274 = vsel %vm862, %v1271, 0
        %1276 = vmatprep.subr.mxu0 0.0
        %1277 = vmatpush1.xpose.msra.mxu0 0.0
        %1278 = vmatprep.subr.mxu0 0.0
        %1279 = vmatpush1.xpose.msra.mxu0 0.0
        %1280 = vmatprep.subr.mxu0 0.0
        %1281 = vmatpush1.xpose.msra.mxu0 0.0
        %1282 = vmatprep.subr.mxu0 0.0
        %1283 = vmatpush1.xpose.msra.mxu0 0.0
        %1284 = vmatprep.subr.mxu0 0.0
        %1285 = vmatpush1.xpose.msra.mxu0 0.0
        %1286 = vmatprep.subr.mxu0 0.0
        %1287 = vmatpush1.xpose.msra.mxu0 0.0
        %1288 = vmatprep.subr.mxu0 0.0
        %1289 = vmatpush1.xpose.msra.mxu0 0.0
        %1290 = vmatprep.subr.mxu0 0.0
        %1291 = vmatpush1.xpose.msra.mxu0 0.0
        %1292 = vmatprep.subr.mxu0 0.0
        %1293 = vmatpush1.xpose.msra.mxu0 0.0
        %1294 = vmatprep.subr.mxu0 0.0
        %1295 = vmatpush1.xpose.msra.mxu0 0.0
        %1296 = vmatprep.subr.mxu0 0.0
        %1297 = vmatpush1.xpose.msra.mxu0 0.0
        %1298 = vmatprep.subr.mxu0 0.0
        %1299 = vmatpush1.xpose.msra.mxu0 0.0
        %1300 = vmatprep.subr.mxu0 0.0
        %1301 = vmatpush1.xpose.msra.mxu0 0.0
        %1302 = vmatprep.subr.mxu0 0.0
        %1303 = vmatpush1.xpose.msra.mxu0 0.0
        %1304 = vmatprep.subr.mxu0 0.0
        %1305 = vmatpush1.xpose.msra.mxu0 0.0
        %1306 = vmatprep.subr.mxu0 0.0
        %1307 = vmatpush1.xpose.msra.mxu0 %v1274
        %1308 = vmatprep.subr.mxu0 0.0
        %1309 = vmatpush2.xpose.msra.mxu0 0.0
        %1310 = vmatprep.subr.mxu0 0.0
        %1311 = vmatpush2.xpose.msra.mxu0 0.0
        %1312 = vmatprep.subr.mxu0 0.0
        %1313 = vmatpush2.xpose.msra.mxu0 0.0
        %1314 = vmatprep.subr.mxu0 0.0
        %1315 = vmatpush2.xpose.msra.mxu0 0.0
        %1316 = vmatprep.subr.mxu0 0.0
        %1317 = vmatpush2.xpose.msra.mxu0 0.0
        %1318 = vmatprep.subr.mxu0 0.0
        %1319 = vmatpush2.xpose.msra.mxu0 0.0
        %1320 = vmatprep.subr.mxu0 0.0
        %1321 = vmatpush2.xpose.msra.mxu0 0.0
        %1322 = vmatprep.subr.mxu0 0.0
        %1323 = vmatpush2.xpose.msra.mxu0 0.0
        %1324 = vmatprep.subr.mxu0 0.0
        %1325 = vmatpush2.xpose.msra.mxu0 0.0
        %1326 = vmatprep.subr.mxu0 0.0
        %1327 = vmatpush2.xpose.msra.mxu0 0.0
        %1328 = vmatprep.subr.mxu0 0.0
        %1329 = vmatpush2.xpose.msra.mxu0 0.0
        %1330 = vmatprep.subr.mxu0 0.0
        %1331 = vmatpush2.xpose.msra.mxu0 0.0
        %1332 = vmatprep.subr.mxu0 0.0
        %1333 = vmatpush2.xpose.msra.mxu0 0.0
        %1334 = vmatprep.subr.mxu0 0.0
        %1335 = vmatpush2.xpose.msra.mxu0 0.0
        %1336 = vmatprep.subr.mxu0 0.0
        %1337 = vmatpush2.xpose.msra.mxu0 0.0
        %1338 = vmatprep.subr.mxu0 0.0
        %1339 = vmatpush2.xpose.msra.mxu0 0.0
        %1340 = vmatprep.mubr.f32.mxu0 0.0
        %1341 = vmatmul.mubr.f32.gmra.mxu0 %v1272
        %v1342 = vpop.f32.mrf.mxu0
        %v1343 = vadd.f32 %v1265, %v1342
        %v1344 = vpop.f32.mrf.mxu0
        %1345 = vdwg.mxu0
        %v1346 = vmul.f32 %v1343, 0.17677669
        %v1347 = vadd.f32 %v1346, %v946
        %v1348 = vsel %vm1104, %v1347, -inf
        %1349 = vmax.xlane.f32.xlu0 %v1348
        %v1350 = vpop.xlane.xlu0 %1349
        %v1351 = vsub.f32 %v1347, %v1350
        %v1352 = vmul.f32 %v1351, 1.442695
        %v1353 = vpow.pop %v1352
        %v1354 = vsel %vm1104, %v1353, 0.0
        %1355 = vadd.xlane.f32.xlu0 %v1354
        %v1356 = vpop.xlane.xlu0 %1355
        %v1357 = vrcp.pop %v1356
        %v1358 = vmul.f32 %v1353, %v1357
        %1359 = vrot.lane.b32.xlu0 %v852, 48
        %v1360 = vpop.permute.xlu0 %1359
        %v1363 = vsel %vm1104, %v1358, 0
        %1365 = vmatprep.subr.mxu0 0.0
        %1366 = vmatpush1.msra.mxu0 0.0
        %1367 = vmatprep.subr.mxu0 0.0
        %1368 = vmatpush1.msra.mxu0 0.0
        %1369 = vmatprep.subr.mxu0 0.0
        %1370 = vmatpush1.msra.mxu0 0.0
        %1371 = vmatprep.subr.mxu0 0.0
        %1372 = vmatpush1.msra.mxu0 0.0
        %1373 = vmatprep.subr.mxu0 0.0
        %1374 = vmatpush1.msra.mxu0 0.0
        %1375 = vmatprep.subr.mxu0 0.0
        %1376 = vmatpush1.msra.mxu0 0.0
        %1377 = vmatprep.subr.mxu0 0.0
        %1378 = vmatpush1.msra.mxu0 0.0
        %1379 = vmatprep.subr.mxu0 0.0
        %1380 = vmatpush1.msra.mxu0 0.0
        %1381 = vmatprep.subr.mxu0 0.0
        %1382 = vmatpush1.msra.mxu0 0.0
        %1383 = vmatprep.subr.mxu0 0.0
        %1384 = vmatpush1.msra.mxu0 0.0
        %1385 = vmatprep.subr.mxu0 0.0
        %1386 = vmatpush1.msra.mxu0 0.0
        %1387 = vmatprep.subr.mxu0 0.0
        %1388 = vmatpush1.msra.mxu0 0.0
        %1389 = vmatprep.subr.mxu0 0.0
        %1390 = vmatpush1.msra.mxu0 0.0
        %1391 = vmatprep.subr.mxu0 0.0
        %1392 = vmatpush1.msra.mxu0 0.0
        %1393 = vmatprep.subr.mxu0 0.0
        %1394 = vmatpush1.msra.mxu0 0.0
        %1395 = vmatprep.subr.mxu0 0.0
        %1396 = vmatpush1.msra.mxu0 %v1360
        %1397 = vmatprep.subr.mxu0 0.0
        %1398 = vmatpush2.msra.mxu0 0.0
        %1399 = vmatprep.subr.mxu0 0.0
        %1400 = vmatpush2.msra.mxu0 0.0
        %1401 = vmatprep.subr.mxu0 0.0
        %1402 = vmatpush2.msra.mxu0 0.0
        %1403 = vmatprep.subr.mxu0 0.0
        %1404 = vmatpush2.msra.mxu0 0.0
        %1405 = vmatprep.subr.mxu0 0.0
        %1406 = vmatpush2.msra.mxu0 0.0
        %1407 = vmatprep.subr.mxu0 0.0
        %1408 = vmatpush2.msra.mxu0 0.0
        %1409 = vmatprep.subr.mxu0 0.0
        %1410 = vmatpush2.msra.mxu0 0.0
        %1411 = vmatprep.subr.mxu0 0.0
        %1412 = vmatpush2.msra.mxu0 0.0
        %1413 = vmatprep.subr.mxu0 0.0
        %1414 = vmatpush2.msra.mxu0 0.0
        %1415 = vmatprep.subr.mxu0 0.0
        %1416 = vmatpush2.msra.mxu0 0.0
        %1417 = vmatprep.subr.mxu0 0.0
        %1418 = vmatpush2.msra.mxu0 0.0
        %1419 = vmatprep.subr.mxu0 0.0
        %1420 = vmatpush2.msra.mxu0 0.0
        %1421 = vmatprep.subr.mxu0 0.0
        %1422 = vmatpush2.msra.mxu0 0.0
        %1423 = vmatprep.subr.mxu0 0.0
        %1424 = vmatpush2.msra.mxu0 0.0
        %1425 = vmatprep.subr.mxu0 0.0
        %1426 = vmatpush2.msra.mxu0 0.0
        %1427 = vmatprep.subr.mxu0 0.0
        %1428 = vmatpush2.msra.mxu0 0.0
        %1429 = vmatprep.mubr.f32.mxu0 0.0
        %1430 = vmatmul.mubr.f32.gmra.mxu0 %v1363
        %v1431 = vpop.f32.mrf.mxu0
        %v1432 = vadd.f32 0.0, %v1431
        %v1433 = vpop.f32.mrf.mxu0
        %1434 = vdwg.mxu0
        %1436 = vrot.lane.b32.xlu0 %v1432, 16
        %v1437 = vpop.permute.xlu0 %1436
        %vm1439 = vcmask 261248
        %1440 = vst.msk [vmem:[#allocation2] sm:$0xff] %vm1439, %v1437
        %s1441 = scalar_lea.vmem %s425, 8 [#allocation12]
        %1442 = vst.msk [vmem:[%s1441] sm:$0xff] %vm1104, %v1358
        %1443 = vrot.lane.b32.xlu0 %v691, 32
        %v1444 = vpop.permute.xlu0 %1443
        %v1445 = vsel %vm862, %v1444, 0
        %1447 = vmatprep.subr.mxu0 0.0
        %1448 = vmatpush1.xpose.msra.mxu0 0.0
        %1449 = vmatprep.subr.mxu0 0.0
        %1450 = vmatpush1.xpose.msra.mxu0 0.0
        %1451 = vmatprep.subr.mxu0 0.0
        %1452 = vmatpush1.xpose.msra.mxu0 0.0
        %1453 = vmatprep.subr.mxu0 0.0
        %1454 = vmatpush1.xpose.msra.mxu0 0.0
        %1455 = vmatprep.subr.mxu0 0.0
        %1456 = vmatpush1.xpose.msra.mxu0 0.0
        %1457 = vmatprep.subr.mxu0 0.0
        %1458 = vmatpush1.xpose.msra.mxu0 0.0
        %1459 = vmatprep.subr.mxu0 0.0
        %1460 = vmatpush1.xpose.msra.mxu0 0.0
        %1461 = vmatprep.subr.mxu0 0.0
        %1462 = vmatpush1.xpose.msra.mxu0 0.0
        %1463 = vmatprep.subr.mxu0 0.0
        %1464 = vmatpush1.xpose.msra.mxu0 0.0
        %1465 = vmatprep.subr.mxu0 0.0
        %1466 = vmatpush1.xpose.msra.mxu0 0.0
        %1467 = vmatprep.subr.mxu0 0.0
        %1468 = vmatpush1.xpose.msra.mxu0 0.0
        %1469 = vmatprep.subr.mxu0 0.0
        %1470 = vmatpush1.xpose.msra.mxu0 0.0
        %1471 = vmatprep.subr.mxu0 0.0
        %1472 = vmatpush1.xpose.msra.mxu0 0.0
        %1473 = vmatprep.subr.mxu0 0.0
        %1474 = vmatpush1.xpose.msra.mxu0 0.0
        %1475 = vmatprep.subr.mxu0 0.0
        %1476 = vmatpush1.xpose.msra.mxu0 0.0
        %1477 = vmatprep.subr.mxu0 0.0
        %1478 = vmatpush1.xpose.msra.mxu0 %v955
        %1479 = vmatprep.subr.mxu0 0.0
        %1480 = vmatpush2.xpose.msra.mxu0 0.0
        %1481 = vmatprep.subr.mxu0 0.0
        %1482 = vmatpush2.xpose.msra.mxu0 0.0
        %1483 = vmatprep.subr.mxu0 0.0
        %1484 = vmatpush2.xpose.msra.mxu0 0.0
        %1485 = vmatprep.subr.mxu0 0.0
        %1486 = vmatpush2.xpose.msra.mxu0 0.0
        %1487 = vmatprep.subr.mxu0 0.0
        %1488 = vmatpush2.xpose.msra.mxu0 0.0
        %1489 = vmatprep.subr.mxu0 0.0
        %1490 = vmatpush2.xpose.msra.mxu0 0.0
        %1491 = vmatprep.subr.mxu0 0.0
        %1492 = vmatpush2.xpose.msra.mxu0 0.0
        %1493 = vmatprep.subr.mxu0 0.0
        %1494 = vmatpush2.xpose.msra.mxu0 0.0
        %1495 = vmatprep.subr.mxu0 0.0
        %1496 = vmatpush2.xpose.msra.mxu0 0.0
        %1497 = vmatprep.subr.mxu0 0.0
        %1498 = vmatpush2.xpose.msra.mxu0 0.0
        %1499 = vmatprep.subr.mxu0 0.0
        %1500 = vmatpush2.xpose.msra.mxu0 0.0
        %1501 = vmatprep.subr.mxu0 0.0
        %1502 = vmatpush2.xpose.msra.mxu0 0.0
        %1503 = vmatprep.subr.mxu0 0.0
        %1504 = vmatpush2.xpose.msra.mxu0 0.0
        %1505 = vmatprep.subr.mxu0 0.0
        %1506 = vmatpush2.xpose.msra.mxu0 0.0
        %1507 = vmatprep.subr.mxu0 0.0
        %1508 = vmatpush2.xpose.msra.mxu0 0.0
        %1509 = vmatprep.subr.mxu0 0.0
        %1510 = vmatpush2.xpose.msra.mxu0 0.0
        %1511 = vmatprep.mubr.f32.mxu0 0.0
        %1512 = vmatmul.mubr.f32.gmra.mxu0 %v1445
        %v1513 = vpop.f32.mrf.mxu0
        %v1514 = vadd.f32 0.0, %v1513
        %v1515 = vpop.f32.mrf.mxu0
        %1516 = vdwg.mxu0
        %1517 = vrot.lane.b32.xlu0 %v603, 96
        %v1518 = vpop.permute.xlu0 %1517
        %1519 = vrot.lane.b32.xlu0 %v852, 96
        %v1520 = vpop.permute.xlu0 %1519
        %v1521 = vsel %vm862, %v1518, 0
        %v1523 = vsel %vm862, %v1520, 0
        %1525 = vmatprep.subr.mxu0 0.0
        %1526 = vmatpush1.xpose.msra.mxu0 0.0
        %1527 = vmatprep.subr.mxu0 0.0
        %1528 = vmatpush1.xpose.msra.mxu0 0.0
        %1529 = vmatprep.subr.mxu0 0.0
        %1530 = vmatpush1.xpose.msra.mxu0 0.0
        %1531 = vmatprep.subr.mxu0 0.0
        %1532 = vmatpush1.xpose.msra.mxu0 0.0
        %1533 = vmatprep.subr.mxu0 0.0
        %1534 = vmatpush1.xpose.msra.mxu0 0.0
        %1535 = vmatprep.subr.mxu0 0.0
        %1536 = vmatpush1.xpose.msra.mxu0 0.0
        %1537 = vmatprep.subr.mxu0 0.0
        %1538 = vmatpush1.xpose.msra.mxu0 0.0
        %1539 = vmatprep.subr.mxu0 0.0
        %1540 = vmatpush1.xpose.msra.mxu0 0.0
        %1541 = vmatprep.subr.mxu0 0.0
        %1542 = vmatpush1.xpose.msra.mxu0 0.0
        %1543 = vmatprep.subr.mxu0 0.0
        %1544 = vmatpush1.xpose.msra.mxu0 0.0
        %1545 = vmatprep.subr.mxu0 0.0
        %1546 = vmatpush1.xpose.msra.mxu0 0.0
        %1547 = vmatprep.subr.mxu0 0.0
        %1548 = vmatpush1.xpose.msra.mxu0 0.0
        %1549 = vmatprep.subr.mxu0 0.0
        %1550 = vmatpush1.xpose.msra.mxu0 0.0
        %1551 = vmatprep.subr.mxu0 0.0
        %1552 = vmatpush1.xpose.msra.mxu0 0.0
        %1553 = vmatprep.subr.mxu0 0.0
        %1554 = vmatpush1.xpose.msra.mxu0 0.0
        %1555 = vmatprep.subr.mxu0 0.0
        %1556 = vmatpush1.xpose.msra.mxu0 %v1523
        %1557 = vmatprep.subr.mxu0 0.0
        %1558 = vmatpush2.xpose.msra.mxu0 0.0
        %1559 = vmatprep.subr.mxu0 0.0
        %1560 = vmatpush2.xpose.msra.mxu0 0.0
        %1561 = vmatprep.subr.mxu0 0.0
        %1562 = vmatpush2.xpose.msra.mxu0 0.0
        %1563 = vmatprep.subr.mxu0 0.0
        %1564 = vmatpush2.xpose.msra.mxu0 0.0
        %1565 = vmatprep.subr.mxu0 0.0
        %1566 = vmatpush2.xpose.msra.mxu0 0.0
        %1567 = vmatprep.subr.mxu0 0.0
        %1568 = vmatpush2.xpose.msra.mxu0 0.0
        %1569 = vmatprep.subr.mxu0 0.0
        %1570 = vmatpush2.xpose.msra.mxu0 0.0
        %1571 = vmatprep.subr.mxu0 0.0
        %1572 = vmatpush2.xpose.msra.mxu0 0.0
        %1573 = vmatprep.subr.mxu0 0.0
        %1574 = vmatpush2.xpose.msra.mxu0 0.0
        %1575 = vmatprep.subr.mxu0 0.0
        %1576 = vmatpush2.xpose.msra.mxu0 0.0
        %1577 = vmatprep.subr.mxu0 0.0
        %1578 = vmatpush2.xpose.msra.mxu0 0.0
        %1579 = vmatprep.subr.mxu0 0.0
        %1580 = vmatpush2.xpose.msra.mxu0 0.0
        %1581 = vmatprep.subr.mxu0 0.0
        %1582 = vmatpush2.xpose.msra.mxu0 0.0
        %1583 = vmatprep.subr.mxu0 0.0
        %1584 = vmatpush2.xpose.msra.mxu0 0.0
        %1585 = vmatprep.subr.mxu0 0.0
        %1586 = vmatpush2.xpose.msra.mxu0 0.0
        %1587 = vmatprep.subr.mxu0 0.0
        %1588 = vmatpush2.xpose.msra.mxu0 0.0
        %1589 = vmatprep.mubr.f32.mxu0 0.0
        %1590 = vmatmul.mubr.f32.gmra.mxu0 %v1521
        %v1591 = vpop.f32.mrf.mxu0
        %v1592 = vadd.f32 %v1514, %v1591
        %v1593 = vpop.f32.mrf.mxu0
        %1594 = vdwg.mxu0
        %v1595 = vmul.f32 %v1592, 0.17677669
        %v1596 = vadd.f32 %v1595, %v946
        %v1597 = vsel %vm1104, %v1596, -inf
        %1598 = vmax.xlane.f32.xlu0 %v1597
        %v1599 = vpop.xlane.xlu0 %1598
        %v1600 = vsub.f32 %v1596, %v1599
        %v1601 = vmul.f32 %v1600, 1.442695
        %v1602 = vpow.pop %v1601
        %v1603 = vsel %vm1104, %v1602, 0.0
        %1604 = vadd.xlane.f32.xlu0 %v1603
        %v1605 = vpop.xlane.xlu0 %1604
        %v1606 = vrcp.pop %v1605
        %v1607 = vmul.f32 %v1602, %v1606
        %1608 = vrot.lane.b32.xlu0 %v852, 32
        %v1609 = vpop.permute.xlu0 %1608
        %v1612 = vsel %vm1104, %v1607, 0
        %1614 = vmatprep.subr.mxu0 0.0
        %1615 = vmatpush1.msra.mxu0 0.0
        %1616 = vmatprep.subr.mxu0 0.0
        %1617 = vmatpush1.msra.mxu0 0.0
        %1618 = vmatprep.subr.mxu0 0.0
        %1619 = vmatpush1.msra.mxu0 0.0
        %1620 = vmatprep.subr.mxu0 0.0
        %1621 = vmatpush1.msra.mxu0 0.0
        %1622 = vmatprep.subr.mxu0 0.0
        %1623 = vmatpush1.msra.mxu0 0.0
        %1624 = vmatprep.subr.mxu0 0.0
        %1625 = vmatpush1.msra.mxu0 0.0
        %1626 = vmatprep.subr.mxu0 0.0
        %1627 = vmatpush1.msra.mxu0 0.0
        %1628 = vmatprep.subr.mxu0 0.0
        %1629 = vmatpush1.msra.mxu0 0.0
        %1630 = vmatprep.subr.mxu0 0.0
        %1631 = vmatpush1.msra.mxu0 0.0
        %1632 = vmatprep.subr.mxu0 0.0
        %1633 = vmatpush1.msra.mxu0 0.0
        %1634 = vmatprep.subr.mxu0 0.0
        %1635 = vmatpush1.msra.mxu0 0.0
        %1636 = vmatprep.subr.mxu0 0.0
        %1637 = vmatpush1.msra.mxu0 0.0
        %1638 = vmatprep.subr.mxu0 0.0
        %1639 = vmatpush1.msra.mxu0 0.0
        %1640 = vmatprep.subr.mxu0 0.0
        %1641 = vmatpush1.msra.mxu0 0.0
        %1642 = vmatprep.subr.mxu0 0.0
        %1643 = vmatpush1.msra.mxu0 0.0
        %1644 = vmatprep.subr.mxu0 0.0
        %1645 = vmatpush1.msra.mxu0 %v1609
        %1646 = vmatprep.subr.mxu0 0.0
        %1647 = vmatpush2.msra.mxu0 0.0
        %1648 = vmatprep.subr.mxu0 0.0
        %1649 = vmatpush2.msra.mxu0 0.0
        %1650 = vmatprep.subr.mxu0 0.0
        %1651 = vmatpush2.msra.mxu0 0.0
        %1652 = vmatprep.subr.mxu0 0.0
        %1653 = vmatpush2.msra.mxu0 0.0
        %1654 = vmatprep.subr.mxu0 0.0
        %1655 = vmatpush2.msra.mxu0 0.0
        %1656 = vmatprep.subr.mxu0 0.0
        %1657 = vmatpush2.msra.mxu0 0.0
        %1658 = vmatprep.subr.mxu0 0.0
        %1659 = vmatpush2.msra.mxu0 0.0
        %1660 = vmatprep.subr.mxu0 0.0
        %1661 = vmatpush2.msra.mxu0 0.0
        %1662 = vmatprep.subr.mxu0 0.0
        %1663 = vmatpush2.msra.mxu0 0.0
        %1664 = vmatprep.subr.mxu0 0.0
        %1665 = vmatpush2.msra.mxu0 0.0
        %1666 = vmatprep.subr.mxu0 0.0
        %1667 = vmatpush2.msra.mxu0 0.0
        %1668 = vmatprep.subr.mxu0 0.0
        %1669 = vmatpush2.msra.mxu0 0.0
        %1670 = vmatprep.subr.mxu0 0.0
        %1671 = vmatpush2.msra.mxu0 0.0
        %1672 = vmatprep.subr.mxu0 0.0
        %1673 = vmatpush2.msra.mxu0 0.0
        %1674 = vmatprep.subr.mxu0 0.0
        %1675 = vmatpush2.msra.mxu0 0.0
        %1676 = vmatprep.subr.mxu0 0.0
        %1677 = vmatpush2.msra.mxu0 0.0
        %1678 = vmatprep.mubr.f32.mxu0 0.0
        %1679 = vmatmul.mubr.f32.gmra.mxu0 %v1612
        %v1680 = vpop.f32.mrf.mxu0
        %v1681 = vadd.f32 0.0, %v1680
        %v1682 = vpop.f32.mrf.mxu0
        %1683 = vdwg.mxu0
        %1685 = vrot.lane.b32.xlu0 %v1681, 32
        %v1686 = vpop.permute.xlu0 %1685
        %vm1688 = vcmask 392448
        %1689 = vst.msk [vmem:[#allocation2] sm:$0xff] %vm1688, %v1686
        %s1690 = scalar_lea.vmem %s425, 16 [#allocation12]
        %1691 = vst.msk [vmem:[%s1690] sm:$0xff] %vm1104, %v1607
        %1692 = vrot.lane.b32.xlu0 %v691, 16
        %v1693 = vpop.permute.xlu0 %1692
        %v1694 = vsel %vm862, %v1693, 0
        %1696 = vmatprep.subr.mxu0 0.0
        %1697 = vmatpush1.xpose.msra.mxu0 0.0
        %1698 = vmatprep.subr.mxu0 0.0
        %1699 = vmatpush1.xpose.msra.mxu0 0.0
        %1700 = vmatprep.subr.mxu0 0.0
        %1701 = vmatpush1.xpose.msra.mxu0 0.0
        %1702 = vmatprep.subr.mxu0 0.0
        %1703 = vmatpush1.xpose.msra.mxu0 0.0
        %1704 = vmatprep.subr.mxu0 0.0
        %1705 = vmatpush1.xpose.msra.mxu0 0.0
        %1706 = vmatprep.subr.mxu0 0.0
        %1707 = vmatpush1.xpose.msra.mxu0 0.0
        %1708 = vmatprep.subr.mxu0 0.0
        %1709 = vmatpush1.xpose.msra.mxu0 0.0
        %1710 = vmatprep.subr.mxu0 0.0
        %1711 = vmatpush1.xpose.msra.mxu0 0.0
        %1712 = vmatprep.subr.mxu0 0.0
        %1713 = vmatpush1.xpose.msra.mxu0 0.0
        %1714 = vmatprep.subr.mxu0 0.0
        %1715 = vmatpush1.xpose.msra.mxu0 0.0
        %1716 = vmatprep.subr.mxu0 0.0
        %1717 = vmatpush1.xpose.msra.mxu0 0.0
        %1718 = vmatprep.subr.mxu0 0.0
        %1719 = vmatpush1.xpose.msra.mxu0 0.0
        %1720 = vmatprep.subr.mxu0 0.0
        %1721 = vmatpush1.xpose.msra.mxu0 0.0
        %1722 = vmatprep.subr.mxu0 0.0
        %1723 = vmatpush1.xpose.msra.mxu0 0.0
        %1724 = vmatprep.subr.mxu0 0.0
        %1725 = vmatpush1.xpose.msra.mxu0 0.0
        %1726 = vmatprep.subr.mxu0 0.0
        %1727 = vmatpush1.xpose.msra.mxu0 %v955
        %1728 = vmatprep.subr.mxu0 0.0
        %1729 = vmatpush2.xpose.msra.mxu0 0.0
        %1730 = vmatprep.subr.mxu0 0.0
        %1731 = vmatpush2.xpose.msra.mxu0 0.0
        %1732 = vmatprep.subr.mxu0 0.0
        %1733 = vmatpush2.xpose.msra.mxu0 0.0
        %1734 = vmatprep.subr.mxu0 0.0
        %1735 = vmatpush2.xpose.msra.mxu0 0.0
        %1736 = vmatprep.subr.mxu0 0.0
        %1737 = vmatpush2.xpose.msra.mxu0 0.0
        %1738 = vmatprep.subr.mxu0 0.0
        %1739 = vmatpush2.xpose.msra.mxu0 0.0
        %1740 = vmatprep.subr.mxu0 0.0
        %1741 = vmatpush2.xpose.msra.mxu0 0.0
        %1742 = vmatprep.subr.mxu0 0.0
        %1743 = vmatpush2.xpose.msra.mxu0 0.0
        %1744 = vmatprep.subr.mxu0 0.0
        %1745 = vmatpush2.xpose.msra.mxu0 0.0
        %1746 = vmatprep.subr.mxu0 0.0
        %1747 = vmatpush2.xpose.msra.mxu0 0.0
        %1748 = vmatprep.subr.mxu0 0.0
        %1749 = vmatpush2.xpose.msra.mxu0 0.0
        %1750 = vmatprep.subr.mxu0 0.0
        %1751 = vmatpush2.xpose.msra.mxu0 0.0
        %1752 = vmatprep.subr.mxu0 0.0
        %1753 = vmatpush2.xpose.msra.mxu0 0.0
        %1754 = vmatprep.subr.mxu0 0.0
        %1755 = vmatpush2.xpose.msra.mxu0 0.0
        %1756 = vmatprep.subr.mxu0 0.0
        %1757 = vmatpush2.xpose.msra.mxu0 0.0
        %1758 = vmatprep.subr.mxu0 0.0
        %1759 = vmatpush2.xpose.msra.mxu0 0.0
        %1760 = vmatprep.mubr.f32.mxu0 0.0
        %1761 = vmatmul.mubr.f32.gmra.mxu0 %v1694
        %v1762 = vpop.f32.mrf.mxu0
        %v1763 = vadd.f32 0.0, %v1762
        %v1764 = vpop.f32.mrf.mxu0
        %1765 = vdwg.mxu0
        %1766 = vrot.lane.b32.xlu0 %v603, 80
        %v1767 = vpop.permute.xlu0 %1766
        %1768 = vrot.lane.b32.xlu0 %v852, 80
        %v1769 = vpop.permute.xlu0 %1768
        %v1770 = vsel %vm862, %v1767, 0
        %v1772 = vsel %vm862, %v1769, 0
        %1774 = vmatprep.subr.mxu0 0.0
        %1775 = vmatpush1.xpose.msra.mxu0 0.0
        %1776 = vmatprep.subr.mxu0 0.0
        %1777 = vmatpush1.xpose.msra.mxu0 0.0
        %1778 = vmatprep.subr.mxu0 0.0
        %1779 = vmatpush1.xpose.msra.mxu0 0.0
        %1780 = vmatprep.subr.mxu0 0.0
        %1781 = vmatpush1.xpose.msra.mxu0 0.0
        %1782 = vmatprep.subr.mxu0 0.0
        %1783 = vmatpush1.xpose.msra.mxu0 0.0
        %1784 = vmatprep.subr.mxu0 0.0
        %1785 = vmatpush1.xpose.msra.mxu0 0.0
        %1786 = vmatprep.subr.mxu0 0.0
        %1787 = vmatpush1.xpose.msra.mxu0 0.0
        %1788 = vmatprep.subr.mxu0 0.0
        %1789 = vmatpush1.xpose.msra.mxu0 0.0
        %1790 = vmatprep.subr.mxu0 0.0
        %1791 = vmatpush1.xpose.msra.mxu0 0.0
        %1792 = vmatprep.subr.mxu0 0.0
        %1793 = vmatpush1.xpose.msra.mxu0 0.0
        %1794 = vmatprep.subr.mxu0 0.0
        %1795 = vmatpush1.xpose.msra.mxu0 0.0
        %1796 = vmatprep.subr.mxu0 0.0
        %1797 = vmatpush1.xpose.msra.mxu0 0.0
        %1798 = vmatprep.subr.mxu0 0.0
        %1799 = vmatpush1.xpose.msra.mxu0 0.0
        %1800 = vmatprep.subr.mxu0 0.0
        %1801 = vmatpush1.xpose.msra.mxu0 0.0
        %1802 = vmatprep.subr.mxu0 0.0
        %1803 = vmatpush1.xpose.msra.mxu0 0.0
        %1804 = vmatprep.subr.mxu0 0.0
        %1805 = vmatpush1.xpose.msra.mxu0 %v1772
        %1806 = vmatprep.subr.mxu0 0.0
        %1807 = vmatpush2.xpose.msra.mxu0 0.0
        %1808 = vmatprep.subr.mxu0 0.0
        %1809 = vmatpush2.xpose.msra.mxu0 0.0
        %1810 = vmatprep.subr.mxu0 0.0
        %1811 = vmatpush2.xpose.msra.mxu0 0.0
        %1812 = vmatprep.subr.mxu0 0.0
        %1813 = vmatpush2.xpose.msra.mxu0 0.0
        %1814 = vmatprep.subr.mxu0 0.0
        %1815 = vmatpush2.xpose.msra.mxu0 0.0
        %1816 = vmatprep.subr.mxu0 0.0
        %1817 = vmatpush2.xpose.msra.mxu0 0.0
        %1818 = vmatprep.subr.mxu0 0.0
        %1819 = vmatpush2.xpose.msra.mxu0 0.0
        %1820 = vmatprep.subr.mxu0 0.0
        %1821 = vmatpush2.xpose.msra.mxu0 0.0
        %1822 = vmatprep.subr.mxu0 0.0
        %1823 = vmatpush2.xpose.msra.mxu0 0.0
        %1824 = vmatprep.subr.mxu0 0.0
        %1825 = vmatpush2.xpose.msra.mxu0 0.0
        %1826 = vmatprep.subr.mxu0 0.0
        %1827 = vmatpush2.xpose.msra.mxu0 0.0
        %1828 = vmatprep.subr.mxu0 0.0
        %1829 = vmatpush2.xpose.msra.mxu0 0.0
        %1830 = vmatprep.subr.mxu0 0.0
        %1831 = vmatpush2.xpose.msra.mxu0 0.0
        %1832 = vmatprep.subr.mxu0 0.0
        %1833 = vmatpush2.xpose.msra.mxu0 0.0
        %1834 = vmatprep.subr.mxu0 0.0
        %1835 = vmatpush2.xpose.msra.mxu0 0.0
        %1836 = vmatprep.subr.mxu0 0.0
        %1837 = vmatpush2.xpose.msra.mxu0 0.0
        %1838 = vmatprep.mubr.f32.mxu0 0.0
        %1839 = vmatmul.mubr.f32.gmra.mxu0 %v1770
        %v1840 = vpop.f32.mrf.mxu0
        %v1841 = vadd.f32 %v1763, %v1840
        %v1842 = vpop.f32.mrf.mxu0
        %1843 = vdwg.mxu0
        %v1844 = vmul.f32 %v1841, 0.17677669
        %v1845 = vadd.f32 %v1844, %v946
        %v1846 = vsel %vm1104, %v1845, -inf
        %1847 = vmax.xlane.f32.xlu0 %v1846
        %v1848 = vpop.xlane.xlu0 %1847
        %v1849 = vsub.f32 %v1845, %v1848
        %v1850 = vmul.f32 %v1849, 1.442695
        %v1851 = vpow.pop %v1850
        %v1852 = vsel %vm1104, %v1851, 0.0
        %1853 = vadd.xlane.f32.xlu0 %v1852
        %v1854 = vpop.xlane.xlu0 %1853
        %v1855 = vrcp.pop %v1854
        %v1856 = vmul.f32 %v1851, %v1855
        %1857 = vrot.lane.b32.xlu0 %v852, 16
        %v1858 = vpop.permute.xlu0 %1857
        %v1861 = vsel %vm1104, %v1856, 0
        %1863 = vmatprep.subr.mxu0 0.0
        %1864 = vmatpush1.msra.mxu0 0.0
        %1865 = vmatprep.subr.mxu0 0.0
        %1866 = vmatpush1.msra.mxu0 0.0
        %1867 = vmatprep.subr.mxu0 0.0
        %1868 = vmatpush1.msra.mxu0 0.0
        %1869 = vmatprep.subr.mxu0 0.0
        %1870 = vmatpush1.msra.mxu0 0.0
        %1871 = vmatprep.subr.mxu0 0.0
        %1872 = vmatpush1.msra.mxu0 0.0
        %1873 = vmatprep.subr.mxu0 0.0
        %1874 = vmatpush1.msra.mxu0 0.0
        %1875 = vmatprep.subr.mxu0 0.0
        %1876 = vmatpush1.msra.mxu0 0.0
        %1877 = vmatprep.subr.mxu0 0.0
        %1878 = vmatpush1.msra.mxu0 0.0
        %1879 = vmatprep.subr.mxu0 0.0
        %1880 = vmatpush1.msra.mxu0 0.0
        %1881 = vmatprep.subr.mxu0 0.0
        %1882 = vmatpush1.msra.mxu0 0.0
        %1883 = vmatprep.subr.mxu0 0.0
        %1884 = vmatpush1.msra.mxu0 0.0
        %1885 = vmatprep.subr.mxu0 0.0
        %1886 = vmatpush1.msra.mxu0 0.0
        %1887 = vmatprep.subr.mxu0 0.0
        %1888 = vmatpush1.msra.mxu0 0.0
        %1889 = vmatprep.subr.mxu0 0.0
        %1890 = vmatpush1.msra.mxu0 0.0
        %1891 = vmatprep.subr.mxu0 0.0
        %1892 = vmatpush1.msra.mxu0 0.0
        %1893 = vmatprep.subr.mxu0 0.0
        %1894 = vmatpush1.msra.mxu0 %v1858
        %1895 = vmatprep.subr.mxu0 0.0
        %1896 = vmatpush2.msra.mxu0 0.0
        %1897 = vmatprep.subr.mxu0 0.0
        %1898 = vmatpush2.msra.mxu0 0.0
        %1899 = vmatprep.subr.mxu0 0.0
        %1900 = vmatpush2.msra.mxu0 0.0
        %1901 = vmatprep.subr.mxu0 0.0
        %1902 = vmatpush2.msra.mxu0 0.0
        %1903 = vmatprep.subr.mxu0 0.0
        %1904 = vmatpush2.msra.mxu0 0.0
        %1905 = vmatprep.subr.mxu0 0.0
        %1906 = vmatpush2.msra.mxu0 0.0
        %1907 = vmatprep.subr.mxu0 0.0
        %1908 = vmatpush2.msra.mxu0 0.0
        %1909 = vmatprep.subr.mxu0 0.0
        %1910 = vmatpush2.msra.mxu0 0.0
        %1911 = vmatprep.subr.mxu0 0.0
        %1912 = vmatpush2.msra.mxu0 0.0
        %1913 = vmatprep.subr.mxu0 0.0
        %1914 = vmatpush2.msra.mxu0 0.0
        %1915 = vmatprep.subr.mxu0 0.0
        %1916 = vmatpush2.msra.mxu0 0.0
        %1917 = vmatprep.subr.mxu0 0.0
        %1918 = vmatpush2.msra.mxu0 0.0
        %1919 = vmatprep.subr.mxu0 0.0
        %1920 = vmatpush2.msra.mxu0 0.0
        %1921 = vmatprep.subr.mxu0 0.0
        %1922 = vmatpush2.msra.mxu0 0.0
        %1923 = vmatprep.subr.mxu0 0.0
        %1924 = vmatpush2.msra.mxu0 0.0
        %1925 = vmatprep.subr.mxu0 0.0
        %1926 = vmatpush2.msra.mxu0 0.0
        %1927 = vmatprep.mubr.f32.mxu0 0.0
        %1928 = vmatmul.mubr.f32.gmra.mxu0 %v1861
        %v1929 = vpop.f32.mrf.mxu0
        %v1930 = vadd.f32 0.0, %v1929
        %v1931 = vpop.f32.mrf.mxu0
        %1932 = vdwg.mxu0
        %1934 = vrot.lane.b32.xlu0 %v1930, 48
        %v1935 = vpop.permute.xlu0 %1934
        %vm1937 = vcmask 523648
        %1938 = vst.msk [vmem:[#allocation2] sm:$0xff] %vm1937, %v1935
        %s1939 = scalar_lea.vmem %s425, 24 [#allocation12]
        %1940 = vst.msk [vmem:[%s1939] sm:$0xff] %vm1104, %v1856
        %v1941 = vld [vmem:[#allocation2] sm:$0xff]
        %v1942 = vld [vmem:[%s8] sm:$0xff]
        %v1943 = vld [vmem:[%s8 + $0x8] sm:$0xff]
        %v1944 = vld [vmem:[%s8 + $0x10] sm:$0xff]
        %v1945 = vld [vmem:[%s8 + $0x18] sm:$0xff]
        %v1946 = vld [vmem:[%s8 + $0x20] sm:$0xff]
        %v1947 = vld [vmem:[%s8 + $0x28] sm:$0xff]
        %v1948 = vld [vmem:[%s8 + $0x30] sm:$0xff]
        %v1949 = vld [vmem:[%s8 + $0x38] sm:$0xff]
        %v1951 = vsel %vm445, %v1941, 0
        %1953 = vmatprep.subr.mxu0 0.0
        %1954 = vmatpush1.msra.mxu0 0.0
        %1955 = vmatprep.subr.mxu0 0.0
        %1956 = vmatpush1.msra.mxu0 0.0
        %1957 = vmatprep.subr.mxu0 0.0
        %1958 = vmatpush1.msra.mxu0 0.0
        %1959 = vmatprep.subr.mxu0 0.0
        %1960 = vmatpush1.msra.mxu0 0.0
        %1961 = vmatprep.subr.mxu0 0.0
        %1962 = vmatpush1.msra.mxu0 0.0
        %1963 = vmatprep.subr.mxu0 0.0
        %1964 = vmatpush1.msra.mxu0 0.0
        %1965 = vmatprep.subr.mxu0 0.0
        %1966 = vmatpush1.msra.mxu0 0.0
        %1967 = vmatprep.subr.mxu0 0.0
        %1968 = vmatpush1.msra.mxu0 0.0
        %1969 = vmatprep.subr.mxu0 0.0
        %1970 = vmatpush1.msra.mxu0 %v1949
        %1971 = vmatprep.subr.mxu0 0.0
        %1972 = vmatpush1.msra.mxu0 %v1948
        %1973 = vmatprep.subr.mxu0 0.0
        %1974 = vmatpush1.msra.mxu0 %v1947
        %1975 = vmatprep.subr.mxu0 0.0
        %1976 = vmatpush1.msra.mxu0 %v1946
        %1977 = vmatprep.subr.mxu0 0.0
        %1978 = vmatpush1.msra.mxu0 %v1945
        %1979 = vmatprep.subr.mxu0 0.0
        %1980 = vmatpush1.msra.mxu0 %v1944
        %1981 = vmatprep.subr.mxu0 0.0
        %1982 = vmatpush1.msra.mxu0 %v1943
        %1983 = vmatprep.subr.mxu0 0.0
        %1984 = vmatpush1.msra.mxu0 %v1942
        %1985 = vmatprep.subr.mxu0 0.0
        %1986 = vmatpush2.msra.mxu0 0.0
        %1987 = vmatprep.subr.mxu0 0.0
        %1988 = vmatpush2.msra.mxu0 0.0
        %1989 = vmatprep.subr.mxu0 0.0
        %1990 = vmatpush2.msra.mxu0 0.0
        %1991 = vmatprep.subr.mxu0 0.0
        %1992 = vmatpush2.msra.mxu0 0.0
        %1993 = vmatprep.subr.mxu0 0.0
        %1994 = vmatpush2.msra.mxu0 0.0
        %1995 = vmatprep.subr.mxu0 0.0
        %1996 = vmatpush2.msra.mxu0 0.0
        %1997 = vmatprep.subr.mxu0 0.0
        %1998 = vmatpush2.msra.mxu0 0.0
        %1999 = vmatprep.subr.mxu0 0.0
        %2000 = vmatpush2.msra.mxu0 0.0
        %2001 = vmatprep.subr.mxu0 0.0
        %2002 = vmatpush2.msra.mxu0 0.0
        %2003 = vmatprep.subr.mxu0 0.0
        %2004 = vmatpush2.msra.mxu0 0.0
        %2005 = vmatprep.subr.mxu0 0.0
        %2006 = vmatpush2.msra.mxu0 0.0
        %2007 = vmatprep.subr.mxu0 0.0
        %2008 = vmatpush2.msra.mxu0 0.0
        %2009 = vmatprep.subr.mxu0 0.0
        %2010 = vmatpush2.msra.mxu0 0.0
        %2011 = vmatprep.subr.mxu0 0.0
        %2012 = vmatpush2.msra.mxu0 0.0
        %2013 = vmatprep.subr.mxu0 0.0
        %2014 = vmatpush2.msra.mxu0 0.0
        %2015 = vmatprep.subr.mxu0 0.0
        %2016 = vmatpush2.msra.mxu0 0.0
        %2017 = vmatprep.mubr.f32.mxu0 0.0
        %2018 = vmatmul.mubr.f32.gmra.mxu0 %v1951
        %v2019 = vpop.f32.mrf.mxu0
        %v2020 = vadd.f32 0.0, %v2019
        %v2021 = vpop.f32.mrf.mxu0
        %2022 = vdwg.mxu0
        %2023 = vst.msk [vmem:[%s418] sm:$0xff] %vm445, %v2020
        %s2024 = sand.u32 %s235, 1
        %s2025 = scalar_lea.sflag [#allocation5], %s2024
        %s2026 = sand.u32 %s235, 1
        %s2027 = smul.addr %s2026, 8
        %s2028 = scalar_lea.vmem [#allocation11], %s2027
        %s2029 = sand.u32 %s261, 1
        %s2030 = scalar_lea.sflag [#allocation13], %s2029
        %s2031 = sand.u32 %s261, 1
        %s2032 = smul.addr %s2031, 32
        %s2033 = scalar_lea.vmem [#allocation12], %s2032
        // Predicated region
        $region73: #{tpu_custom_call.1} parent=55 // pred_check
          %p2034 = pneg %p245
        $region74: #{tpu_custom_call.1} parent=55 // pred_check_branch
          %2036 = sbr.rel (%p2034) target = $region76
        $region75: #{tpu_custom_call.1} parent=55 // pred_region
          %s2038 = ssub.s32 128, 128
          %2039 = vsyncadd %s2025, %s2038
          %s2040 = smul.addr %s33, 128
          %s2041 = scalar_lea.hbm %s9, %s2040
          %s2043 = sshll.u32 %s2028, 4
          %s2044 = int_to_ptr.vmem [resolvable:$true] %s2043
          %2046 = dma.vmem_to_hbm [thread:$0]  %s2044, 128, %s2041, %s2025
        $region76: #{tpu_custom_call.1} parent=55 // pred_fallthru
          _
        // Predicated region
        $region77: #{tpu_custom_call.1} parent=55 // pred_check
          %p2047 = pneg %p271
        $region78: #{tpu_custom_call.1} parent=55 // pred_check_branch
          %2049 = sbr.rel (%p2047) target = $region80
        $region79: #{tpu_custom_call.1} parent=55 // pred_region
          %s2051 = ssub.s32 512, 512
          %2052 = vsyncadd %s2030, %s2051
          %s2053 = smul.addr %s33, 4
          %s2054 = smul.addr %s2053, 128
          %s2055 = scalar_lea.hbm %s10, %s2054
          %s2056 = sshll.u32 %s2033, 4
          %s2057 = int_to_ptr.vmem [resolvable:$true] %s2056
          %2062 = dma.vmem_to_hbm [thread:$0]  %s2057, 512, %s2055, %s2030, 128, 128, 8
        $region80: #{tpu_custom_call.1} parent=55 // pred_fallthru
          _
      $region56: #{tpu_custom_call.1} parent=5 // pred_fallthru
        _
      %p2063 = scmp.le.s32.totalorder 2, %s28
      // Predicated region
      $region81: #{tpu_custom_call.1} parent=5 // pred_check
        %p2064 = pneg %p2063
      $region82: #{tpu_custom_call.1} parent=5 // pred_check_branch
        %2066 = sbr.rel (%p2064) target = $region84
      $region83: #{tpu_custom_call.1} parent=5 // pred_region
        %s2067 = ssub.s32 %s28, 2
        // Predicated region
        $region85: #{tpu_custom_call.1} parent=83 // pred_check
          %p2068 = pneg %p251
        $region86: #{tpu_custom_call.1} parent=83 // pred_check_branch
          %2070 = sbr.rel (%p2068) target = $region88
        $region87: #{tpu_custom_call.1} parent=83 // pred_region
          %s2071 = sand.u32 %s236, 1
          %s2072 = scalar_lea.sflag [#allocation5], %s2071
          %s2073 = sand.u32 %s236, 1
          %s2074 = smul.addr %s2073, 8
          %s2075 = scalar_lea.vmem [#allocation11], %s2074
          %2076 = dma.done %s2072, 128
        $region88: #{tpu_custom_call.1} parent=83 // pred_fallthru
          _
        // Predicated region
        $region89: #{tpu_custom_call.1} parent=83 // pred_check
          %p2077 = pneg %p277
        $region90: #{tpu_custom_call.1} parent=83 // pred_check_branch
          %2079 = sbr.rel (%p2077) target = $region92
        $region91: #{tpu_custom_call.1} parent=83 // pred_region
          %s2080 = sand.u32 %s262, 1
          %s2081 = scalar_lea.sflag [#allocation13], %s2080
          %s2082 = sand.u32 %s262, 1
          %s2083 = smul.addr %s2082, 32
          %s2084 = scalar_lea.vmem [#allocation12], %s2083
          %2085 = dma.done %s2081, 512
        $region92: #{tpu_custom_call.1} parent=83 // pred_fallthru
          _
      $region84: #{tpu_custom_call.1} parent=5 // pred_fallthru
        _
    $region6: #{tpu_custom_call.1} parent=1 // loop_footer
      %s32 = sadd.s32 1, %s28
    $region7: #{tpu_custom_call.1} parent=1 // loop_footer_branch
      %27 = sbr.rel target = $region3
    $region8: #{tpu_custom_call.1} parent=1 // loop_exit
      _
    %2086 = vsyncpa [#allocation4], 1
    %s2087 = scalar_lea.sflag [#allocation4], 1
    %2088 = vsyncpa %s2087, 1
    %2089 = vsyncpa [#allocation7], 1
    %2090 = vsyncpa [#allocation10], 1
    %2091 = vsyncpa [#allocation5], 1
    %s2092 = scalar_lea.sflag [#allocation5], 1
    %2093 = vsyncpa %s2092, 1
    %2094 = vsyncpa [#allocation13], 1
    %s2095 = scalar_lea.sflag [#allocation13], 1
    %2096 = vsyncpa %s2095, 1

</llo_original>
